<compile_context>
chip_gen: v5e
topology: v5e:2x2
jax: 0.10.0
libtpu: 0.0.40
codegen_flags: <defaults>
</compile_context>

<pallas_src>
import functools

import jax
import jax.numpy as jnp
from jax.experimental import pallas as pl
from jax.experimental.pallas import tpu as pltpu


_ARB = pltpu.CompilerParams(dimension_semantics=("arbitrary",))


# ---------------------------------------------------------------------------
# Pallas kernels
# ---------------------------------------------------------------------------
def _encoder_kernel(x_ref, w1_ref, b1_ref, w2_ref, b2_ref,
                    w5_ref, b5_ref, w6_ref, b6_ref, z_ref):
    """conv1 -> conv2 -> (dropout: identity at inference) -> conv5 -> conv6.

    Rows = (batch, latent_time); columns = (local_time, channel) raster, so
    each conv (kernel == stride) is one dense matmul against a block-diagonal
    weight.  All intermediates stay in vregs/VMEM.
    """
    h = x_ref[...]
    for w_ref, b_ref in ((w1_ref, b1_ref), (w2_ref, b2_ref),
                         (w5_ref, b5_ref), (w6_ref, b6_ref)):
        h = jnp.dot(h, w_ref[...], preferred_element_type=jnp.float32) + b_ref[...]
        h = jnp.maximum(h, 0.0)
    z_ref[...] = h


def _vq_kernel(x_ref, w_ref, nh_ref, idx_ref, q_ref, loss_ref, *,
               commitment_cost):
    """Nearest-codebook lookup + one-hot gather + (1 + beta) * MSE loss."""
    x = x_ref[...]                           # (N, E) rows in torch NCL-flat order
    w = w_ref[...]                           # (Ne, E) codebook
    n, e = x.shape
    n_emb = w.shape[0]

    # argmin_j ||x - w_j||^2 == argmax_j (x.w_j - 0.5*||w_j||^2); the
    # -0.5*||w||^2 term arrives as a precomputed (1, Ne) row (VPU add), not a
    # rank-1 MXU broadcast.
    score = jax.lax.dot_general(x, w, (((1,), (1,)), ((), ())),
                                preferred_element_type=jnp.float32)
    score = score + nh_ref[...]                                       # (N, Ne)

    best = jnp.max(score, axis=1, keepdims=True)                      # (N, 1)
    lane_iota = jax.lax.broadcasted_iota(jnp.int32, score.shape, 1)   # (N, Ne)
    # First index attaining the optimum (matches torch.argmin tie-breaking).
    idx_col = jnp.min(jnp.where(score >= best, lane_iota, n_emb),
                      axis=1, keepdims=True)                          # (N, 1)
    onehot = (lane_iota == idx_col).astype(jnp.float32)               # (N, Ne)

    q = jnp.dot(onehot, w, preferred_element_type=jnp.float32)        # (N, E)
    q_ref[...] = q

    # Lane-dense (1, N) index output, produced directly by a tiny matmul
    # instead of a (N, 1) masked store.
    iota_row = jax.lax.broadcasted_iota(jnp.int32, (1, n_emb), 1).astype(jnp.float32)
    idx_row = jax.lax.dot_general(iota_row, onehot, (((1,), (1,)), ((), ())),
                                  preferred_element_type=jnp.float32)  # (1, N)
    idx_ref[...] = idx_row.astype(jnp.int32)

    # q_latent + commitment * e_latent; both forward values equal mse(q, x),
    # so the reduction is done exactly once.
    sq = (q - x) * (q - x)
    row_sum = jnp.sum(sq, axis=1, keepdims=True)                       # (N, 1)
    total = jnp.sum(row_sum, axis=0, keepdims=True)                    # (1, 1)
    loss_ref[...] = ((1.0 + commitment_cost) / float(n * e)) * total


def _decoder_kernel(q_ref, w1_ref, b1_ref, w2_ref, b2_ref, w3_ref, b3_ref,
                    w6_ref, b6_ref, main_ref, tail_ref, *,
                    hidden_dim, k2, k3, k6, out_dim):
    """deconv1..deconv3 (+ReLU) and deconv6 fused.  K == stride everywhere, so
    each layer is a dense matmul against a block-diagonal weight whose output
    columns are already in (fine_time, channel) order — no scatter-add."""
    def dot(a, b):
        return jnp.dot(a, b, preferred_element_type=jnp.float32)

    q = q_ref[...]                                                     # (N, E)
    d1 = jnp.maximum(dot(q, w1_ref[...]) + b1_ref[...], 0.0)
    d2 = jnp.maximum(dot(d1, w2_ref[...]) + b2_ref[...], 0.0)
    d3 = jnp.maximum(dot(d2, w3_ref[...]) + b3_ref[...], 0.0)
    main_ref[...] = dot(d3, w6_ref[...]) + b6_ref[...]

    # output_padding=1 on deconv1 appends one extra time step per sample whose
    # deconv1 value is just relu(bias).  It is batch-independent, so it is
    # pushed through the remaining layers once (re-using prefixes of the
    # block-diagonal operands) and broadcast outside the kernel.
    h = hidden_dim
    t1 = jnp.maximum(b1_ref[:, :h], 0.0)                               # (1, H)
    t2 = jnp.maximum(dot(t1, w2_ref[:h, :k2 * h]) + b2_ref[:, :k2 * h], 0.0)
    t3 = jnp.maximum(dot(t2, w3_ref[:k2 * h, :k2 * k3 * h])
                     + b3_ref[:, :k2 * k3 * h], 0.0)
    tail_ref[...] = (dot(t3, w6_ref[:k2 * k3 * h, :k2 * k3 * k6 * out_dim])
                     + b6_ref[:, :k2 * k3 * k6 * out_dim])


# ---------------------------------------------------------------------------
# pallas_call wrappers (whole-array blocks; every operand is tiny)
# ---------------------------------------------------------------------------
def _full_specs(args):
    return [pl.BlockSpec(a.shape, lambda i: (0, 0)) for a in args]


def encoder_call(xb, w1, b1, w2, b2, w5, b5, w6, b6):
    n = xb.shape[0]
    e = w6.shape[1]
    args = (xb, w1, b1, w2, b2, w5, b5, w6, b6)
    return pl.pallas_call(
        _encoder_kernel,
        out_shape=jax.ShapeDtypeStruct((n, e), jnp.float32),
        grid=(1,),
        in_specs=_full_specs(args),
        out_specs=pl.BlockSpec((n, e), lambda i: (0, 0)),
        compiler_params=_ARB,
    )(*args)


def vq_call(flat, codebook, neg_half_w2, commitment_cost):
    n, e = flat.shape
    ne = codebook.shape[0]
    args = (flat, codebook, neg_half_w2)
    kernel = functools.partial(_vq_kernel, commitment_cost=commitment_cost)
    return pl.pallas_call(
        kernel,
        out_shape=(jax.ShapeDtypeStruct((1, n), jnp.int32),
                   jax.ShapeDtypeStruct((n, e), jnp.float32),
                   jax.ShapeDtypeStruct((1, 1), jnp.float32)),
        grid=(1,),
        in_specs=_full_specs(args),
        out_specs=(pl.BlockSpec((1, n), lambda i: (0, 0)),
                   pl.BlockSpec((n, e), lambda i: (0, 0)),
                   pl.BlockSpec((1, 1), lambda i: (0, 0))),
        compiler_params=_ARB,
    )(*args)


def decoder_call(q_nlc, w1, b1, w2, b2, w3, b3, w6, b6, *,
                 hidden_dim, k1, k2, k3, k6, out_dim):
    n = q_nlc.shape[0]
    main_w = k1 * k2 * k3 * k6 * out_dim
    tail_w = k2 * k3 * k6 * out_dim
    args = (q_nlc, w1, b1, w2, b2, w3, b3, w6, b6)
    kernel = functools.partial(_decoder_kernel, hidden_dim=hidden_dim,
                               k2=k2, k3=k3, k6=k6, out_dim=out_dim)
    return pl.pallas_call(
        kernel,
        out_shape=(jax.ShapeDtypeStruct((n, main_w), jnp.float32),
                   jax.ShapeDtypeStruct((1, tail_w), jnp.float32)),
        grid=(1,),
        in_specs=_full_specs(args),
        out_specs=(pl.BlockSpec((n, main_w), lambda i: (0, 0)),
                   pl.BlockSpec((1, tail_w), lambda i: (0, 0))),
        compiler_params=_ARB,
    )(*args)


# ---------------------------------------------------------------------------
# Weight packing: PyTorch conv layouts -> block-diagonal matmul operands
# ---------------------------------------------------------------------------
def _conv_block_operand(w, b, n_blocks):
    """Conv1d weight (Cout, Cin, K) -> (n_blocks*K*Cin, n_blocks*Cout) blockdiag;
    input rows are ordered (tap k, input channel) inside each block."""
    cout, cin, k = w.shape
    wm = jnp.transpose(w, (2, 1, 0)).reshape(k * cin, cout)
    wbd = jnp.kron(jnp.eye(n_blocks, dtype=w.dtype), wm)
    bt = jnp.tile(b, n_blocks).reshape(1, -1)
    return wbd, bt


def _deconv_block_operand(w, b, n_blocks):
    """ConvTranspose1d weight (Cin, Cout, K) -> (n_blocks*Cin, n_blocks*K*Cout)
    blockdiag; output columns are ordered (tap k, output channel), i.e. already
    in time order because K == stride (no overlap-add needed)."""
    cin, cout, k = w.shape
    wm = jnp.transpose(w, (0, 2, 1)).reshape(cin, k * cout)
    wbd = jnp.kron(jnp.eye(n_blocks, dtype=w.dtype), wm)
    bt = jnp.tile(b, n_blocks * k).reshape(1, -1)
    return wbd, bt


# ---------------------------------------------------------------------------
# VQVAE forward
# ---------------------------------------------------------------------------
def make_vqvae_forward(config):
    ks = config["kernel_size"]
    ss = config["stride_size"]
    # TODO(synk): the fused (reshape-free) path assumes kernel_size == stride
    # (true for this module's config and for the fixed 4/4 layers); an
    # overlapping-window configuration would need an im2col / overlap-add path.
    assert ks == ss, "fused Pallas path assumes kernel_size == stride_size"

    cc = float(config["commitment_cost"])
    use_nor = bool(config["use_nor"])
    hd = config["hidden_dim"]
    ed = config["embedding_dim"]
    out_dim = config["input_dim"]
    rf = 4 * 4 * ss * ss            # encoder downsample factor per latent step
    k1, k2, k3, k6 = ks, ks, 4, 4   # decoder kernel (== stride) sizes

    def forward(params, x):
        b, cin, length = x.shape
        assert length % rf == 0, "input length must divide the downsample factor"
        lz = length // rf
        n = b * lz

        # Pack weights into block-diagonal matmul operands (tiny, O(KB)).
        ew1, eb1 = _conv_block_operand(params["e_w1"], params["e_b1"], rf // 4)
        ew2, eb2 = _conv_block_operand(params["e_w2"], params["e_b2"], rf // 16)
        ew5, eb5 = _conv_block_operand(params["e_w5"], params["e_b5"], rf // (16 * ss))
        ew6, eb6 = _conv_block_operand(params["e_w6"], params["e_b6"], 1)
        dw1, db1 = _deconv_block_operand(params["d_w1"], params["d_b1"], 1)
        dw2, db2 = _deconv_block_operand(params["d_w2"], params["d_b2"], k1)
        dw3, db3 = _deconv_block_operand(params["d_w3"], params["d_b3"], k1 * k2)
        dw6, db6 = _deconv_block_operand(params["d_w6"], params["d_b6"], k1 * k2 * k3)
        codebook = params["codebook"]
        neg_half_w2 = (-0.5 * jnp.sum(codebook * codebook, axis=1)).reshape(1, -1)

        # ---- encoder: one fused pallas_call (NCL -> blocked channels-last) ----
        xb = x.astype(jnp.float32).transpose(0, 2, 1).reshape(n, rf * cin)
        z_nlc = encoder_call(xb, ew1, eb1, ew2, eb2, ew5, eb5, ew6, eb6)  # (N, E)

        # ---- vector quantizer ----
        z_ncl = z_nlc.reshape(b, lz, ed).transpose(0, 2, 1)               # (B, E, Lz)
        if use_nor:
            i_mean = jnp.mean(z_ncl, axis=2, keepdims=True)
            i_std = jnp.std(z_ncl, axis=2, keepdims=True, ddof=1)
            z_ncl = (z_ncl - i_mean) / (i_std + 1e-7)
        flat = z_ncl.reshape(-1, ed)            # torch's raw NCL reshape(-1, E)
        idx_row, q_flat, loss = vq_call(flat, codebook, neg_half_w2, cc)
        vq_loss = loss[0, 0]
        encoding_indices = idx_row.reshape(-1, 1)
        # Straight-through: forward value of x + (q - x).detach() is q.
        # TODO(synk): stop_gradient / custom VJP needed if this is differentiated.
        quantized_ncl = q_flat.reshape(b, ed, lz)
        if use_nor:
            quantized_ncl = quantized_ncl * (i_std + 1e-7) + i_mean

        # ---- decoder: one fused pallas_call ----
        q_nlc = quantized_ncl.transpose(0, 2, 1).reshape(n, ed)
        main, tail = decoder_call(q_nlc, dw1, db1, dw2, db2, dw3, db3, dw6, db6,
                                  hidden_dim=hd, k1=k1, k2=k2, k3=k3, k6=k6,
                                  out_dim=out_dim)
        lblk = main.shape[1] // out_dim
        ltail = tail.shape[1] // out_dim
        main = main.reshape(b, lz * lblk, out_dim)
        tail = jnp.broadcast_to(tail.reshape(1, ltail, out_dim), (b, ltail, out_dim))
        x_recon = jnp.concatenate([main, tail], axis=1).transpose(0, 2, 1)
        return x_recon, vq_loss, encoding_indices, quantized_ncl

    return jax.jit(forward)


# ---------------------------------------------------------------------------
# Plain-XLA reference implementation (for in-script validation only)
# ---------------------------------------------------------------------------
def _conv1d_ref(x, w, b, stride):
    B, Cin, Lin = x.shape
    Cout, _, K = w.shape
    Lout = (Lin - K) // stride + 1
    idxs = jnp.arange(Lout)[:, None] * stride + jnp.arange(K)[None, :]
    patches = x[:, :, idxs]                                    # (B, Cin, Lout, K)
    return jnp.einsum("bclk,ock->bol", patches, w,
                      precision="highest") + b[None, :, None]


def _deconv1d_ref(x, w, b, stride, output_padding=0):
    B, Cin, Lin = x.shape
    _, Cout, K = w.shape
    Lout = (Lin - 1) * stride + K + output_padding
    y = jnp.einsum("bci,cok->boik", x, w, precision="highest")  # (B, Cout, Lin, K)
    out = jnp.zeros((B, Cout, Lout), jnp.float32)
    pos = jnp.arange(Lin) * stride
    for k in range(K):
        out = out.at[:, :, pos + k].add(y[:, :, :, k])
    return out + b[None, :, None]


def vqvae_forward_ref(params, x, config):
    ss = config["stride_size"]
    cc = config["commitment_cost"]
    relu = lambda v: jnp.maximum(v, 0.0)
    h = relu(_conv1d_ref(x.astype(jnp.float32), params["e_w1"], params["e_b1"], 4))
    h = relu(_conv1d_ref(h, params["e_w2"], params["e_b2"], 4))
    h = relu(_conv1d_ref(h, params["e_w5"], params["e_b5"], ss))
    z = relu(_conv1d_ref(h, params["e_w6"], params["e_b6"], ss))
    cb = params["codebook"]
    flat = z.reshape(-1, cb.shape[1])
    d = (jnp.sum(flat ** 2, axis=1, keepdims=True)
         + jnp.sum(cb ** 2, axis=1)[None, :]
         - 2.0 * jnp.matmul(flat, cb.T, precision="highest"))
    idx = jnp.argmin(d, axis=1)
    q = cb[idx].reshape(z.shape)
    loss = (1.0 + cc) * jnp.mean((q - z) ** 2)
    quantized = q                                                # straight-through fwd
    h = relu(_deconv1d_ref(quantized, params["d_w1"], params["d_b1"], ss, 1))
    h = relu(_deconv1d_ref(h, params["d_w2"], params["d_b2"], ss, 0))
    h = relu(_deconv1d_ref(h, params["d_w3"], params["d_b3"], 4, 0))
    xr = _deconv1d_ref(h, params["d_w6"], params["d_b6"], 4, 0)
    return xr, loss, idx[:, None].astype(jnp.int32), quantized


# ---------------------------------------------------------------------------
# Deterministic parameter init (PyTorch-style uniform fan-in bounds)
# ---------------------------------------------------------------------------
def init_params(key, config):
    input_dim = config["input_dim"]
    hidden_dim = config["hidden_dim"]
    embedding_dim = config["embedding_dim"]
    num_embeddings = config["num_embeddings"]
    kernel_size = config["kernel_size"]
    keys = jax.random.split(key, 17)
    ki = iter(range(17))

    def _u(k, shape, bound):
        return jax.random.uniform(k, shape, jnp.float32, -bound, bound)

    def conv_p(cout, cin, k):
        bound = 1.0 / (cin * k) ** 0.5
        return (_u(keys[next(ki)], (cout, cin, k), bound),
                _u(keys[next(ki)], (cout,), bound))

    def deconv_p(cin, cout, k):
        bound = 1.0 / (cin * k) ** 0.5
        return (_u(keys[next(ki)], (cin, cout, k), bound),
                _u(keys[next(ki)], (cout,), bound))

    p = {}
    p["e_w1"], p["e_b1"] = conv_p(hidden_dim, input_dim, 4)
    p["e_w2"], p["e_b2"] = conv_p(hidden_dim, hidden_dim, 4)
    p["e_w5"], p["e_b5"] = conv_p(hidden_dim, hidden_dim, kernel_size)
    p["e_w6"], p["e_b6"] = conv_p(embedding_dim, hidden_dim, kernel_size)
    p["d_w1"], p["d_b1"] = deconv_p(embedding_dim, hidden_dim, kernel_size)
    p["d_w2"], p["d_b2"] = deconv_p(hidden_dim, hidden_dim, kernel_size)
    p["d_w3"], p["d_b3"] = deconv_p(hidden_dim, hidden_dim, 4)
    p["d_w6"], p["d_b6"] = deconv_p(hidden_dim, input_dim, 4)
    p["codebook"] = jax.random.uniform(
        keys[next(ki)], (num_embeddings, embedding_dim), jnp.float32,
        -1.0 / num_embeddings, 1.0 / num_embeddings)
    return p


# ---------------------------------------------------------------------------
if __name__ == "__main__":
    config = dict(input_dim=1, hidden_dim=16, embedding_dim=8, num_embeddings=32,
                  commitment_cost=0.25, kernel_size=2, stride_size=2, use_nor=False)

    key = jax.random.PRNGKey(0)
    k_param, k_x = jax.random.split(key)
    params = init_params(k_param, config)

    # x: (batch=2, channels=1, length=256) -> latent (2, 8, 4) -> recon (2, 1, 288)
    x = jax.random.normal(k_x, (2, config["input_dim"], 256), jnp.float32)

    vqvae_forward = make_vqvae_forward(config)
    x_recon, vq_loss, encoding_indices, quantized = vqvae_forward(params, x)
    jax.block_until_ready((x_recon, vq_loss, encoding_indices, quantized))

    assert x_recon.shape == (2, config["input_dim"], 288)
    assert quantized.shape == (2, config["embedding_dim"], 4)
    assert encoding_indices.shape == (8, 1)

    # Validate against a plain-XLA reference implementation of the module.
    xr_r, loss_r, idx_r, q_r = vqvae_forward_ref(params, x, config)
    assert jnp.array_equal(encoding_indices, idx_r)
    assert jnp.allclose(quantized, q_r, atol=1e-5, rtol=1e-5)
    assert jnp.allclose(vq_loss, loss_r, atol=1e-4, rtol=1e-3)
    assert jnp.allclose(x_recon, xr_r, atol=1e-3, rtol=1e-3)

    print("KERNEL_OK")
</pallas_src>

<mosaic_0001>
module attributes {stable_mosaic.version = 11 : i64} {
  func.func @_encoder_kernel(%arg0: i32, %arg1: memref<8x64xf32, #tpu.memory_space<vmem>>, %arg2: memref<64x256xf32, #tpu.memory_space<vmem>>, %arg3: memref<1x256xf32, #tpu.memory_space<vmem>>, %arg4: memref<256x64xf32, #tpu.memory_space<vmem>>, %arg5: memref<1x64xf32, #tpu.memory_space<vmem>>, %arg6: memref<64x32xf32, #tpu.memory_space<vmem>>, %arg7: memref<1x32xf32, #tpu.memory_space<vmem>>, %arg8: memref<32x8xf32, #tpu.memory_space<vmem>>, %arg9: memref<1x8xf32, #tpu.memory_space<vmem>>, %arg10: memref<8x8xf32, #tpu.memory_space<vmem>>) attributes {dimension_semantics = [#tpu.dimension_semantics<arbitrary>], iteration_bounds = array<i64: 1>, scalar_prefetch = 0 : i64, scratch_operands = 0 : i64, tpu.core_type = #tpu.core_type<tc>, window_params = [{pipeline_mode = #tpu.pipeline_mode<synchronous>, transform_indices = @transform_0, window_bounds = array<i64: 8, 64>}, {pipeline_mode = #tpu.pipeline_mode<synchronous>, transform_indices = @transform_1, window_bounds = array<i64: 64, 256>}, {pipeline_mode = #tpu.pipeline_mode<synchronous>, transform_indices = @transform_2, window_bounds = array<i64: 1, 256>}, {pipeline_mode = #tpu.pipeline_mode<synchronous>, transform_indices = @transform_3, window_bounds = array<i64: 256, 64>}, {pipeline_mode = #tpu.pipeline_mode<synchronous>, transform_indices = @transform_4, window_bounds = array<i64: 1, 64>}, {pipeline_mode = #tpu.pipeline_mode<synchronous>, transform_indices = @transform_5, window_bounds = array<i64: 64, 32>}, {pipeline_mode = #tpu.pipeline_mode<synchronous>, transform_indices = @transform_6, window_bounds = array<i64: 1, 32>}, {pipeline_mode = #tpu.pipeline_mode<synchronous>, transform_indices = @transform_7, window_bounds = array<i64: 32, 8>}, {pipeline_mode = #tpu.pipeline_mode<synchronous>, transform_indices = @transform_8, window_bounds = array<i64: 1, 8>}, {pipeline_mode = #tpu.pipeline_mode<synchronous>, transform_indices = @transform_9, window_bounds = array<i64: 8, 8>}]} {
    %c0 = arith.constant 0 : index
    %c0_0 = arith.constant 0 : index
    %0 = vector.load %arg1[%c0, %c0_0] : memref<8x64xf32, #tpu.memory_space<vmem>>, vector<8x64xf32>
    %c0_1 = arith.constant 0 : index
    %c0_2 = arith.constant 0 : index
    %1 = vector.load %arg2[%c0_1, %c0_2] : memref<64x256xf32, #tpu.memory_space<vmem>>, vector<64x256xf32>
    %cst = arith.constant dense<0.000000e+00> : vector<8x256xf32>
    %2 = tpu.matmul %0, %1, %cst {dimension_numbers = #tpu.dot_dimension_numbers<[1], [0], [0], [1], [0, 0, 1, 1], [], []>} : vector<8x64xf32>, vector<64x256xf32>, vector<8x256xf32> -> vector<8x256xf32>
    %c0_3 = arith.constant 0 : index
    %c0_4 = arith.constant 0 : index
    %3 = vector.load %arg3[%c0_3, %c0_4] : memref<1x256xf32, #tpu.memory_space<vmem>>, vector<1x256xf32>
    %4 = vector.broadcast %3 : vector<1x256xf32> to vector<8x256xf32>
    %5 = arith.addf %2, %4 : vector<8x256xf32>
    %cst_5 = arith.constant 0.000000e+00 : f32
    %6 = vector.broadcast %cst_5 : f32 to vector<8x256xf32>
    %7 = arith.maximumf %5, %6 : vector<8x256xf32>
    %c0_6 = arith.constant 0 : index
    %c0_7 = arith.constant 0 : index
    %8 = vector.load %arg4[%c0_6, %c0_7] : memref<256x64xf32, #tpu.memory_space<vmem>>, vector<256x64xf32>
    %cst_8 = arith.constant dense<0.000000e+00> : vector<8x64xf32>
    %9 = tpu.matmul %7, %8, %cst_8 {dimension_numbers = #tpu.dot_dimension_numbers<[1], [0], [0], [1], [0, 0, 1, 1], [], []>} : vector<8x256xf32>, vector<256x64xf32>, vector<8x64xf32> -> vector<8x64xf32>
    %c0_9 = arith.constant 0 : index
    %c0_10 = arith.constant 0 : index
    %10 = vector.load %arg5[%c0_9, %c0_10] : memref<1x64xf32, #tpu.memory_space<vmem>>, vector<1x64xf32>
    %11 = vector.broadcast %10 : vector<1x64xf32> to vector<8x64xf32>
    %12 = arith.addf %9, %11 : vector<8x64xf32>
    %cst_11 = arith.constant 0.000000e+00 : f32
    %13 = vector.broadcast %cst_11 : f32 to vector<8x64xf32>
    %14 = arith.maximumf %12, %13 : vector<8x64xf32>
    %c0_12 = arith.constant 0 : index
    %c0_13 = arith.constant 0 : index
    %15 = vector.load %arg6[%c0_12, %c0_13] : memref<64x32xf32, #tpu.memory_space<vmem>>, vector<64x32xf32>
    %cst_14 = arith.constant dense<0.000000e+00> : vector<8x32xf32>
    %16 = tpu.matmul %14, %15, %cst_14 {dimension_numbers = #tpu.dot_dimension_numbers<[1], [0], [0], [1], [0, 0, 1, 1], [], []>} : vector<8x64xf32>, vector<64x32xf32>, vector<8x32xf32> -> vector<8x32xf32>
    %c0_15 = arith.constant 0 : index
    %c0_16 = arith.constant 0 : index
    %17 = vector.load %arg7[%c0_15, %c0_16] : memref<1x32xf32, #tpu.memory_space<vmem>>, vector<1x32xf32>
    %18 = vector.broadcast %17 : vector<1x32xf32> to vector<8x32xf32>
    %19 = arith.addf %16, %18 : vector<8x32xf32>
    %cst_17 = arith.constant 0.000000e+00 : f32
    %20 = vector.broadcast %cst_17 : f32 to vector<8x32xf32>
    %21 = arith.maximumf %19, %20 : vector<8x32xf32>
    %c0_18 = arith.constant 0 : index
    %c0_19 = arith.constant 0 : index
    %22 = vector.load %arg8[%c0_18, %c0_19] : memref<32x8xf32, #tpu.memory_space<vmem>>, vector<32x8xf32>
    %cst_20 = arith.constant dense<0.000000e+00> : vector<8x8xf32>
    %23 = tpu.matmul %21, %22, %cst_20 {dimension_numbers = #tpu.dot_dimension_numbers<[1], [0], [0], [1], [0, 0, 1, 1], [], []>} : vector<8x32xf32>, vector<32x8xf32>, vector<8x8xf32> -> vector<8x8xf32>
    %c0_21 = arith.constant 0 : index
    %c0_22 = arith.constant 0 : index
    %24 = vector.load %arg9[%c0_21, %c0_22] : memref<1x8xf32, #tpu.memory_space<vmem>>, vector<1x8xf32>
    %25 = vector.broadcast %24 : vector<1x8xf32> to vector<8x8xf32>
    %26 = arith.addf %23, %25 : vector<8x8xf32>
    %cst_23 = arith.constant 0.000000e+00 : f32
    %27 = vector.broadcast %cst_23 : f32 to vector<8x8xf32>
    %28 = arith.maximumf %26, %27 : vector<8x8xf32>
    %c0_24 = arith.constant 0 : index
    %c0_25 = arith.constant 0 : index
    %29 = vector.load %arg10[%c0_24, %c0_25] : memref<8x8xf32, #tpu.memory_space<vmem>>, vector<8x8xf32>
    tpu.vector_store %arg10[%c0_24, %c0_25], %28 {strides = array<i32>} : memref<8x8xf32, #tpu.memory_space<vmem>>, vector<8x8xf32>,
    return
  }
  func.func @transform_0(%arg0: i32) -> (i32, i32) {
    %c0_i32 = arith.constant 0 : i32
    %c0_i32_0 = arith.constant 0 : i32
    %c0_i32_1 = arith.constant 0 : i32
    return %c0_i32, %c0_i32_0 : i32, i32
  }
  func.func @transform_1(%arg0: i32) -> (i32, i32) {
    %c0_i32 = arith.constant 0 : i32
    %c0_i32_0 = arith.constant 0 : i32
    %c0_i32_1 = arith.constant 0 : i32
    return %c0_i32, %c0_i32_0 : i32, i32
  }
  func.func @transform_2(%arg0: i32) -> (i32, i32) {
    %c0_i32 = arith.constant 0 : i32
    %c0_i32_0 = arith.constant 0 : i32
    %c0_i32_1 = arith.constant 0 : i32
    return %c0_i32, %c0_i32_0 : i32, i32
  }
  func.func @transform_3(%arg0: i32) -> (i32, i32) {
    %c0_i32 = arith.constant 0 : i32
    %c0_i32_0 = arith.constant 0 : i32
    %c0_i32_1 = arith.constant 0 : i32
    return %c0_i32, %c0_i32_0 : i32, i32
  }
  func.func @transform_4(%arg0: i32) -> (i32, i32) {
    %c0_i32 = arith.constant 0 : i32
    %c0_i32_0 = arith.constant 0 : i32
    %c0_i32_1 = arith.constant 0 : i32
    return %c0_i32, %c0_i32_0 : i32, i32
  }
  func.func @transform_5(%arg0: i32) -> (i32, i32) {
    %c0_i32 = arith.constant 0 : i32
    %c0_i32_0 = arith.constant 0 : i32
    %c0_i32_1 = arith.constant 0 : i32
    return %c0_i32, %c0_i32_0 : i32, i32
  }
  func.func @transform_6(%arg0: i32) -> (i32, i32) {
    %c0_i32 = arith.constant 0 : i32
    %c0_i32_0 = arith.constant 0 : i32
    %c0_i32_1 = arith.constant 0 : i32
    return %c0_i32, %c0_i32_0 : i32, i32
  }
  func.func @transform_7(%arg0: i32) -> (i32, i32) {
    %c0_i32 = arith.constant 0 : i32
    %c0_i32_0 = arith.constant 0 : i32
    %c0_i32_1 = arith.constant 0 : i32
    return %c0_i32, %c0_i32_0 : i32, i32
  }
  func.func @transform_8(%arg0: i32) -> (i32, i32) {
    %c0_i32 = arith.constant 0 : i32
    %c0_i32_0 = arith.constant 0 : i32
    %c0_i32_1 = arith.constant 0 : i32
    return %c0_i32, %c0_i32_0 : i32, i32
  }
  func.func @transform_9(%arg0: i32) -> (i32, i32) {
    %c0_i32 = arith.constant 0 : i32
    %c0_i32_0 = arith.constant 0 : i32
    %c0_i32_1 = arith.constant 0 : i32
    return %c0_i32, %c0_i32_0 : i32, i32
  }
}

module attributes {stable_mosaic.version = 11 : i64} {
  func.func @_vq_kernel(%arg0: i32, %arg1: memref<8x8xf32, #tpu.memory_space<vmem>>, %arg2: memref<32x8xf32, #tpu.memory_space<vmem>>, %arg3: memref<1x32xf32, #tpu.memory_space<vmem>>, %arg4: memref<1x8xi32, #tpu.memory_space<vmem>>, %arg5: memref<8x8xf32, #tpu.memory_space<vmem>>, %arg6: memref<1x1xf32, #tpu.memory_space<vmem>>) attributes {dimension_semantics = [#tpu.dimension_semantics<arbitrary>], iteration_bounds = array<i64: 1>, scalar_prefetch = 0 : i64, scratch_operands = 0 : i64, tpu.core_type = #tpu.core_type<tc>, window_params = [{pipeline_mode = #tpu.pipeline_mode<synchronous>, transform_indices = @transform_0, window_bounds = array<i64: 8, 8>}, {pipeline_mode = #tpu.pipeline_mode<synchronous>, transform_indices = @transform_1, window_bounds = array<i64: 32, 8>}, {pipeline_mode = #tpu.pipeline_mode<synchronous>, transform_indices = @transform_2, window_bounds = array<i64: 1, 32>}, {pipeline_mode = #tpu.pipeline_mode<synchronous>, transform_indices = @transform_3, window_bounds = array<i64: 1, 8>}, {pipeline_mode = #tpu.pipeline_mode<synchronous>, transform_indices = @transform_4, window_bounds = array<i64: 8, 8>}, {pipeline_mode = #tpu.pipeline_mode<synchronous>, transform_indices = @transform_5, window_bounds = array<i64: 1, 1>}]} {
    %c0 = arith.constant 0 : index
    %c0_0 = arith.constant 0 : index
    %0 = vector.load %arg1[%c0, %c0_0] : memref<8x8xf32, #tpu.memory_space<vmem>>, vector<8x8xf32>
    %c0_1 = arith.constant 0 : index
    %c0_2 = arith.constant 0 : index
    %1 = vector.load %arg2[%c0_1, %c0_2] : memref<32x8xf32, #tpu.memory_space<vmem>>, vector<32x8xf32>
    %cst = arith.constant dense<0.000000e+00> : vector<8x32xf32>
    %2 = tpu.matmul %0, %1, %cst {dimension_numbers = #tpu.dot_dimension_numbers<[1], [1], [0], [0], [0, 0, 1, 0], [], []>} : vector<8x8xf32>, vector<32x8xf32>, vector<8x32xf32> -> vector<8x32xf32>
    %c0_3 = arith.constant 0 : index
    %c0_4 = arith.constant 0 : index
    %3 = vector.load %arg3[%c0_3, %c0_4] : memref<1x32xf32, #tpu.memory_space<vmem>>, vector<1x32xf32>
    %4 = vector.broadcast %3 : vector<1x32xf32> to vector<8x32xf32>
    %5 = arith.addf %2, %4 : vector<8x32xf32>
    %cst_5 = arith.constant dense<0xFF800000> : vector<8xf32>
    %6 = vector.multi_reduction <maximumf>, %5, %cst_5 [1] : vector<8x32xf32> to vector<8xf32>
    %7 = vector.shape_cast %6 : vector<8xf32> to vector<8x1xf32>
    %8 = tpu.iota {dimensions = array<i32: 1>} : vector<8x32xi32>
    %9 = vector.broadcast %7 : vector<8x1xf32> to vector<8x32xf32>
    %10 = arith.cmpf oge, %5, %9 : vector<8x32xf32>
    %c32_i32 = arith.constant 32 : i32
    %11 = vector.broadcast %c32_i32 : i32 to vector<8x32xi32>
    %12 = arith.select %10, %8, %11 : vector<8x32xi1>, vector<8x32xi32>
    %cst_6 = arith.constant dense<2147483647> : vector<8xi32>
    %13 = vector.multi_reduction <minsi>, %12, %cst_6 [1] : vector<8x32xi32> to vector<8xi32>
    %14 = vector.shape_cast %13 : vector<8xi32> to vector<8x1xi32>
    %15 = vector.broadcast %14 : vector<8x1xi32> to vector<8x32xi32>
    %16 = arith.cmpi eq, %8, %15 : vector<8x32xi32>
    %17 = arith.extui %16 : vector<8x32xi1> to vector<8x32xi32>
    %18 = arith.sitofp %17 : vector<8x32xi32> to vector<8x32xf32>
    %cst_7 = arith.constant dense<0.000000e+00> : vector<8x8xf32>
    %19 = tpu.matmul %18, %1, %cst_7 {dimension_numbers = #tpu.dot_dimension_numbers<[1], [0], [0], [1], [0, 0, 1, 1], [], []>} : vector<8x32xf32>, vector<32x8xf32>, vector<8x8xf32> -> vector<8x8xf32>
    %c0_8 = arith.constant 0 : index
    %c0_9 = arith.constant 0 : index
    %20 = vector.load %arg5[%c0_8, %c0_9] : memref<8x8xf32, #tpu.memory_space<vmem>>, vector<8x8xf32>
    tpu.vector_store %arg5[%c0_8, %c0_9], %19 {strides = array<i32>} : memref<8x8xf32, #tpu.memory_space<vmem>>, vector<8x8xf32>,
    %21 = tpu.iota {dimensions = array<i32: 1>} : vector<1x32xi32>
    %22 = arith.sitofp %21 : vector<1x32xi32> to vector<1x32xf32>
    %cst_10 = arith.constant dense<0.000000e+00> : vector<1x8xf32>
    %23 = tpu.matmul %22, %18, %cst_10 {dimension_numbers = #tpu.dot_dimension_numbers<[1], [1], [0], [0], [0, 0, 1, 0], [], []>} : vector<1x32xf32>, vector<8x32xf32>, vector<1x8xf32> -> vector<1x8xf32>
    %24 = arith.fptosi %23 : vector<1x8xf32> to vector<1x8xi32>
    %c0_11 = arith.constant 0 : index
    %c0_12 = arith.constant 0 : index
    %25 = vector.load %arg4[%c0_11, %c0_12] : memref<1x8xi32, #tpu.memory_space<vmem>>, vector<1x8xi32>
    tpu.vector_store %arg4[%c0_11, %c0_12], %24 {strides = array<i32>} : memref<1x8xi32, #tpu.memory_space<vmem>>, vector<1x8xi32>,
    %26 = arith.subf %19, %0 : vector<8x8xf32>
    %27 = arith.subf %19, %0 : vector<8x8xf32>
    %28 = arith.mulf %26, %27 : vector<8x8xf32>
    %cst_13 = arith.constant dense<0.000000e+00> : vector<8xf32>
    %29 = vector.multi_reduction <add>, %28, %cst_13 [1] : vector<8x8xf32> to vector<8xf32>
    %30 = vector.shape_cast %29 : vector<8xf32> to vector<8x1xf32>
    %cst_14 = arith.constant dense<0.000000e+00> : vector<1xf32>
    %31 = vector.multi_reduction <add>, %30, %cst_14 [0] : vector<8x1xf32> to vector<1xf32>
    %32 = vector.shape_cast %31 : vector<1xf32> to vector<1x1xf32>
    %cst_15 = arith.constant 0.01953125 : f32
    %33 = vector.broadcast %cst_15 : f32 to vector<1x1xf32>
    %34 = arith.mulf %33, %32 : vector<1x1xf32>
    %c0_16 = arith.constant 0 : index
    %c0_17 = arith.constant 0 : index
    %35 = vector.load %arg6[%c0_16, %c0_17] : memref<1x1xf32, #tpu.memory_space<vmem>>, vector<1x1xf32>
    tpu.vector_store %arg6[%c0_16, %c0_17], %34 {strides = array<i32>} : memref<1x1xf32, #tpu.memory_space<vmem>>, vector<1x1xf32>,
    return
  }
  func.func @transform_0(%arg0: i32) -> (i32, i32) {
    %c0_i32 = arith.constant 0 : i32
    %c0_i32_0 = arith.constant 0 : i32
    %c0_i32_1 = arith.constant 0 : i32
    return %c0_i32, %c0_i32_0 : i32, i32
  }
  func.func @transform_1(%arg0: i32) -> (i32, i32) {
    %c0_i32 = arith.constant 0 : i32
    %c0_i32_0 = arith.constant 0 : i32
    %c0_i32_1 = arith.constant 0 : i32
    return %c0_i32, %c0_i32_0 : i32, i32
  }
  func.func @transform_2(%arg0: i32) -> (i32, i32) {
    %c0_i32 = arith.constant 0 : i32
    %c0_i32_0 = arith.constant 0 : i32
    %c0_i32_1 = arith.constant 0 : i32
    return %c0_i32, %c0_i32_0 : i32, i32
  }
  func.func @transform_3(%arg0: i32) -> (i32, i32) {
    %c0_i32 = arith.constant 0 : i32
    %c0_i32_0 = arith.constant 0 : i32
    %c0_i32_1 = arith.constant 0 : i32
    return %c0_i32, %c0_i32_0 : i32, i32
  }
  func.func @transform_4(%arg0: i32) -> (i32, i32) {
    %c0_i32 = arith.constant 0 : i32
    %c0_i32_0 = arith.constant 0 : i32
    %c0_i32_1 = arith.constant 0 : i32
    return %c0_i32, %c0_i32_0 : i32, i32
  }
  func.func @transform_5(%arg0: i32) -> (i32, i32) {
    %c0_i32 = arith.constant 0 : i32
    %c0_i32_0 = arith.constant 0 : i32
    %c0_i32_1 = arith.constant 0 : i32
    return %c0_i32, %c0_i32_0 : i32, i32
  }
}

module attributes {stable_mosaic.version = 11 : i64} {
  func.func @_decoder_kernel(%arg0: i32, %arg1: memref<8x8xf32, #tpu.memory_space<vmem>>, %arg2: memref<8x32xf32, #tpu.memory_space<vmem>>, %arg3: memref<1x32xf32, #tpu.memory_space<vmem>>, %arg4: memref<32x64xf32, #tpu.memory_space<vmem>>, %arg5: memref<1x64xf32, #tpu.memory_space<vmem>>, %arg6: memref<64x256xf32, #tpu.memory_space<vmem>>, %arg7: memref<1x256xf32, #tpu.memory_space<vmem>>, %arg8: memref<256x64xf32, #tpu.memory_space<vmem>>, %arg9: memref<1x64xf32, #tpu.memory_space<vmem>>, %arg10: memref<8x64xf32, #tpu.memory_space<vmem>>, %arg11: memref<1x32xf32, #tpu.memory_space<vmem>>) attributes {dimension_semantics = [#tpu.dimension_semantics<arbitrary>], iteration_bounds = array<i64: 1>, scalar_prefetch = 0 : i64, scratch_operands = 0 : i64, tpu.core_type = #tpu.core_type<tc>, window_params = [{pipeline_mode = #tpu.pipeline_mode<synchronous>, transform_indices = @transform_0, window_bounds = array<i64: 8, 8>}, {pipeline_mode = #tpu.pipeline_mode<synchronous>, transform_indices = @transform_1, window_bounds = array<i64: 8, 32>}, {pipeline_mode = #tpu.pipeline_mode<synchronous>, transform_indices = @transform_2, window_bounds = array<i64: 1, 32>}, {pipeline_mode = #tpu.pipeline_mode<synchronous>, transform_indices = @transform_3, window_bounds = array<i64: 32, 64>}, {pipeline_mode = #tpu.pipeline_mode<synchronous>, transform_indices = @transform_4, window_bounds = array<i64: 1, 64>}, {pipeline_mode = #tpu.pipeline_mode<synchronous>, transform_indices = @transform_5, window_bounds = array<i64: 64, 256>}, {pipeline_mode = #tpu.pipeline_mode<synchronous>, transform_indices = @transform_6, window_bounds = array<i64: 1, 256>}, {pipeline_mode = #tpu.pipeline_mode<synchronous>, transform_indices = @transform_7, window_bounds = array<i64: 256, 64>}, {pipeline_mode = #tpu.pipeline_mode<synchronous>, transform_indices = @transform_8, window_bounds = array<i64: 1, 64>}, {pipeline_mode = #tpu.pipeline_mode<synchronous>, transform_indices = @transform_9, window_bounds = array<i64: 8, 64>}, {pipeline_mode = #tpu.pipeline_mode<synchronous>, transform_indices = @transform_10, window_bounds = array<i64: 1, 32>}]} {
    %c0 = arith.constant 0 : index
    %c0_0 = arith.constant 0 : index
    %0 = vector.load %arg1[%c0, %c0_0] : memref<8x8xf32, #tpu.memory_space<vmem>>, vector<8x8xf32>
    %c0_1 = arith.constant 0 : index
    %c0_2 = arith.constant 0 : index
    %1 = vector.load %arg2[%c0_1, %c0_2] : memref<8x32xf32, #tpu.memory_space<vmem>>, vector<8x32xf32>
    %cst = arith.constant dense<0.000000e+00> : vector<8x32xf32>
    %2 = tpu.matmul %0, %1, %cst {dimension_numbers = #tpu.dot_dimension_numbers<[1], [0], [0], [1], [0, 0, 1, 1], [], []>} : vector<8x8xf32>, vector<8x32xf32>, vector<8x32xf32> -> vector<8x32xf32>
    %c0_3 = arith.constant 0 : index
    %c0_4 = arith.constant 0 : index
    %3 = vector.load %arg3[%c0_3, %c0_4] : memref<1x32xf32, #tpu.memory_space<vmem>>, vector<1x32xf32>
    %4 = vector.broadcast %3 : vector<1x32xf32> to vector<8x32xf32>
    %5 = arith.addf %2, %4 : vector<8x32xf32>
    %cst_5 = arith.constant 0.000000e+00 : f32
    %6 = vector.broadcast %cst_5 : f32 to vector<8x32xf32>
    %7 = arith.maximumf %5, %6 : vector<8x32xf32>
    %c0_6 = arith.constant 0 : index
    %c0_7 = arith.constant 0 : index
    %8 = vector.load %arg4[%c0_6, %c0_7] : memref<32x64xf32, #tpu.memory_space<vmem>>, vector<32x64xf32>
    %cst_8 = arith.constant dense<0.000000e+00> : vector<8x64xf32>
    %9 = tpu.matmul %7, %8, %cst_8 {dimension_numbers = #tpu.dot_dimension_numbers<[1], [0], [0], [1], [0, 0, 1, 1], [], []>} : vector<8x32xf32>, vector<32x64xf32>, vector<8x64xf32> -> vector<8x64xf32>
    %c0_9 = arith.constant 0 : index
    %c0_10 = arith.constant 0 : index
    %10 = vector.load %arg5[%c0_9, %c0_10] : memref<1x64xf32, #tpu.memory_space<vmem>>, vector<1x64xf32>
    %11 = vector.broadcast %10 : vector<1x64xf32> to vector<8x64xf32>
    %12 = arith.addf %9, %11 : vector<8x64xf32>
    %cst_11 = arith.constant 0.000000e+00 : f32
    %13 = vector.broadcast %cst_11 : f32 to vector<8x64xf32>
    %14 = arith.maximumf %12, %13 : vector<8x64xf32>
    %c0_12 = arith.constant 0 : index
    %c0_13 = arith.constant 0 : index
    %15 = vector.load %arg6[%c0_12, %c0_13] : memref<64x256xf32, #tpu.memory_space<vmem>>, vector<64x256xf32>
    %cst_14 = arith.constant dense<0.000000e+00> : vector<8x256xf32>
    %16 = tpu.matmul %14, %15, %cst_14 {dimension_numbers = #tpu.dot_dimension_numbers<[1], [0], [0], [1], [0, 0, 1, 1], [], []>} : vector<8x64xf32>, vector<64x256xf32>, vector<8x256xf32> -> vector<8x256xf32>
    %c0_15 = arith.constant 0 : index
    %c0_16 = arith.constant 0 : index
    %17 = vector.load %arg7[%c0_15, %c0_16] : memref<1x256xf32, #tpu.memory_space<vmem>>, vector<1x256xf32>
    %18 = vector.broadcast %17 : vector<1x256xf32> to vector<8x256xf32>
    %19 = arith.addf %16, %18 : vector<8x256xf32>
    %cst_17 = arith.constant 0.000000e+00 : f32
    %20 = vector.broadcast %cst_17 : f32 to vector<8x256xf32>
    %21 = arith.maximumf %19, %20 : vector<8x256xf32>
    %c0_18 = arith.constant 0 : index
    %c0_19 = arith.constant 0 : index
    %22 = vector.load %arg8[%c0_18, %c0_19] : memref<256x64xf32, #tpu.memory_space<vmem>>, vector<256x64xf32>
    %cst_20 = arith.constant dense<0.000000e+00> : vector<8x64xf32>
    %23 = tpu.matmul %21, %22, %cst_20 {dimension_numbers = #tpu.dot_dimension_numbers<[1], [0], [0], [1], [0, 0, 1, 1], [], []>} : vector<8x256xf32>, vector<256x64xf32>, vector<8x64xf32> -> vector<8x64xf32>
    %c0_21 = arith.constant 0 : index
    %c0_22 = arith.constant 0 : index
    %24 = vector.load %arg9[%c0_21, %c0_22] : memref<1x64xf32, #tpu.memory_space<vmem>>, vector<1x64xf32>
    %25 = vector.broadcast %24 : vector<1x64xf32> to vector<8x64xf32>
    %26 = arith.addf %23, %25 : vector<8x64xf32>
    %c0_23 = arith.constant 0 : index
    %c0_24 = arith.constant 0 : index
    %27 = vector.load %arg10[%c0_23, %c0_24] : memref<8x64xf32, #tpu.memory_space<vmem>>, vector<8x64xf32>
    tpu.vector_store %arg10[%c0_23, %c0_24], %26 {strides = array<i32>} : memref<8x64xf32, #tpu.memory_space<vmem>>, vector<8x64xf32>,
    %c0_25 = arith.constant 0 : index
    %c0_26 = arith.constant 0 : index
    %28 = vector.load %arg3[%c0_25, %c0_26] : memref<1x32xf32, #tpu.memory_space<vmem>>, vector<1x16xf32>
    %cst_27 = arith.constant 0.000000e+00 : f32
    %29 = vector.broadcast %cst_27 : f32 to vector<1x16xf32>
    %30 = arith.maximumf %28, %29 : vector<1x16xf32>
    %c0_28 = arith.constant 0 : index
    %c0_29 = arith.constant 0 : index
    %31 = vector.load %arg4[%c0_28, %c0_29] : memref<32x64xf32, #tpu.memory_space<vmem>>, vector<16x32xf32>
    %cst_30 = arith.constant dense<0.000000e+00> : vector<1x32xf32>
    %32 = tpu.matmul %30, %31, %cst_30 {dimension_numbers = #tpu.dot_dimension_numbers<[1], [0], [0], [1], [0, 0, 1, 1], [], []>} : vector<1x16xf32>, vector<16x32xf32>, vector<1x32xf32> -> vector<1x32xf32>
    %c0_31 = arith.constant 0 : index
    %c0_32 = arith.constant 0 : index
    %33 = vector.load %arg5[%c0_31, %c0_32] : memref<1x64xf32, #tpu.memory_space<vmem>>, vector<1x32xf32>
    %34 = arith.addf %32, %33 : vector<1x32xf32>
    %cst_33 = arith.constant 0.000000e+00 : f32
    %35 = vector.broadcast %cst_33 : f32 to vector<1x32xf32>
    %36 = arith.maximumf %34, %35 : vector<1x32xf32>
    %c0_34 = arith.constant 0 : index
    %c0_35 = arith.constant 0 : index
    %37 = vector.load %arg6[%c0_34, %c0_35] : memref<64x256xf32, #tpu.memory_space<vmem>>, vector<32x128xf32>
    %cst_36 = arith.constant dense<0.000000e+00> : vector<1x128xf32>
    %38 = tpu.matmul %36, %37, %cst_36 {dimension_numbers = #tpu.dot_dimension_numbers<[1], [0], [0], [1], [0, 0, 1, 1], [], []>} : vector<1x32xf32>, vector<32x128xf32>, vector<1x128xf32> -> vector<1x128xf32>
    %c0_37 = arith.constant 0 : index
    %c0_38 = arith.constant 0 : index
    %39 = vector.load %arg7[%c0_37, %c0_38] : memref<1x256xf32, #tpu.memory_space<vmem>>, vector<1x128xf32>
    %40 = arith.addf %38, %39 : vector<1x128xf32>
    %cst_39 = arith.constant 0.000000e+00 : f32
    %41 = vector.broadcast %cst_39 : f32 to vector<1x128xf32>
    %42 = arith.maximumf %40, %41 : vector<1x128xf32>
    %c0_40 = arith.constant 0 : index
    %c0_41 = arith.constant 0 : index
    %43 = vector.load %arg8[%c0_40, %c0_41] : memref<256x64xf32, #tpu.memory_space<vmem>>, vector<128x32xf32>
    %cst_42 = arith.constant dense<0.000000e+00> : vector<1x32xf32>
    %44 = tpu.matmul %42, %43, %cst_42 {dimension_numbers = #tpu.dot_dimension_numbers<[1], [0], [0], [1], [0, 0, 1, 1], [], []>} : vector<1x128xf32>, vector<128x32xf32>, vector<1x32xf32> -> vector<1x32xf32>
    %c0_43 = arith.constant 0 : index
    %c0_44 = arith.constant 0 : index
    %45 = vector.load %arg9[%c0_43, %c0_44] : memref<1x64xf32, #tpu.memory_space<vmem>>, vector<1x32xf32>
    %46 = arith.addf %44, %45 : vector<1x32xf32>
    %c0_45 = arith.constant 0 : index
    %c0_46 = arith.constant 0 : index
    %47 = vector.load %arg11[%c0_45, %c0_46] : memref<1x32xf32, #tpu.memory_space<vmem>>, vector<1x32xf32>
    tpu.vector_store %arg11[%c0_45, %c0_46], %46 {strides = array<i32>} : memref<1x32xf32, #tpu.memory_space<vmem>>, vector<1x32xf32>,
    return
  }
  func.func @transform_0(%arg0: i32) -> (i32, i32) {
    %c0_i32 = arith.constant 0 : i32
    %c0_i32_0 = arith.constant 0 : i32
    %c0_i32_1 = arith.constant 0 : i32
    return %c0_i32, %c0_i32_0 : i32, i32
  }
  func.func @transform_1(%arg0: i32) -> (i32, i32) {
    %c0_i32 = arith.constant 0 : i32
    %c0_i32_0 = arith.constant 0 : i32
    %c0_i32_1 = arith.constant 0 : i32
    return %c0_i32, %c0_i32_0 : i32, i32
  }
  func.func @transform_2(%arg0: i32) -> (i32, i32) {
    %c0_i32 = arith.constant 0 : i32
    %c0_i32_0 = arith.constant 0 : i32
    %c0_i32_1 = arith.constant 0 : i32
    return %c0_i32, %c0_i32_0 : i32, i32
  }
  func.func @transform_3(%arg0: i32) -> (i32, i32) {
    %c0_i32 = arith.constant 0 : i32
    %c0_i32_0 = arith.constant 0 : i32
    %c0_i32_1 = arith.constant 0 : i32
    return %c0_i32, %c0_i32_0 : i32, i32
  }
  func.func @transform_4(%arg0: i32) -> (i32, i32) {
    %c0_i32 = arith.constant 0 : i32
    %c0_i32_0 = arith.constant 0 : i32
    %c0_i32_1 = arith.constant 0 : i32
    return %c0_i32, %c0_i32_0 : i32, i32
  }
  func.func @transform_5(%arg0: i32) -> (i32, i32) {
    %c0_i32 = arith.constant 0 : i32
    %c0_i32_0 = arith.constant 0 : i32
    %c0_i32_1 = arith.constant 0 : i32
    return %c0_i32, %c0_i32_0 : i32, i32
  }
  func.func @transform_6(%arg0: i32) -> (i32, i32) {
    %c0_i32 = arith.constant 0 : i32
    %c0_i32_0 = arith.constant 0 : i32
    %c0_i32_1 = arith.constant 0 : i32
    return %c0_i32, %c0_i32_0 : i32, i32
  }
  func.func @transform_7(%arg0: i32) -> (i32, i32) {
    %c0_i32 = arith.constant 0 : i32
    %c0_i32_0 = arith.constant 0 : i32
    %c0_i32_1 = arith.constant 0 : i32
    return %c0_i32, %c0_i32_0 : i32, i32
  }
  func.func @transform_8(%arg0: i32) -> (i32, i32) {
    %c0_i32 = arith.constant 0 : i32
    %c0_i32_0 = arith.constant 0 : i32
    %c0_i32_1 = arith.constant 0 : i32
    return %c0_i32, %c0_i32_0 : i32, i32
  }
  func.func @transform_9(%arg0: i32) -> (i32, i32) {
    %c0_i32 = arith.constant 0 : i32
    %c0_i32_0 = arith.constant 0 : i32
    %c0_i32_1 = arith.constant 0 : i32
    return %c0_i32, %c0_i32_0 : i32, i32
  }
  func.func @transform_10(%arg0: i32) -> (i32, i32) {
    %c0_i32 = arith.constant 0 : i32
    %c0_i32_0 = arith.constant 0 : i32
    %c0_i32_1 = arith.constant 0 : i32
    return %c0_i32, %c0_i32_0 : i32, i32
  }
}

</mosaic_0001>

<llo_original>
// kernel: mul.18
$region0: #{mul.18}
  %s0 = inlined_call_operand.vmem [shape: f32[4,16,16], index: 0, kind: input, shape index: {}]
  %s1 = inlined_call_operand.vmem [shape: f32[64,16], index: 1, kind: output, shape index: {}]
  $region1: #{mul.18} parent=0
    #allocation0 [shape = 'u8[65536]{0}', space=vmem, size = 0x10000, scoped, tag = 'scoped mem for input reshape']
    %s3 = ssub.s32 16, 1
    %s4 = scalar_lea.vmem %s0, 60
    %v5 = vld [vmem:[%s4] sm:%s3]
    %s6 = scalar_lea.vmem [#allocation0], 120
    %7 = vst [vmem:[%s6] sm:%s3] %v5
    %s8 = scalar_lea.vmem %s0, 56
    %v9 = vld [vmem:[%s8] sm:%s3]
    %s10 = scalar_lea.vmem [#allocation0], 112
    %11 = vst [vmem:[%s10] sm:%s3] %v9
    %s12 = scalar_lea.vmem %s0, 52
    %v13 = vld [vmem:[%s12] sm:%s3]
    %s14 = scalar_lea.vmem [#allocation0], 104
    %15 = vst [vmem:[%s14] sm:%s3] %v13
    %s16 = scalar_lea.vmem %s0, 48
    %v17 = vld [vmem:[%s16] sm:%s3]
    %s18 = scalar_lea.vmem [#allocation0], 96
    %19 = vst [vmem:[%s18] sm:%s3] %v17
    %s20 = scalar_lea.vmem %s0, 44
    %v21 = vld [vmem:[%s20] sm:%s3]
    %s22 = scalar_lea.vmem [#allocation0], 88
    %23 = vst [vmem:[%s22] sm:%s3] %v21
    %s24 = scalar_lea.vmem %s0, 40
    %v25 = vld [vmem:[%s24] sm:%s3]
    %s26 = scalar_lea.vmem [#allocation0], 80
    %27 = vst [vmem:[%s26] sm:%s3] %v25
    %s28 = scalar_lea.vmem %s0, 36
    %v29 = vld [vmem:[%s28] sm:%s3]
    %s30 = scalar_lea.vmem [#allocation0], 72
    %31 = vst [vmem:[%s30] sm:%s3] %v29
    %s32 = scalar_lea.vmem %s0, 32
    %v33 = vld [vmem:[%s32] sm:%s3]
    %s34 = scalar_lea.vmem [#allocation0], 64
    %35 = vst [vmem:[%s34] sm:%s3] %v33
    %s36 = scalar_lea.vmem %s0, 28
    %v37 = vld [vmem:[%s36] sm:%s3]
    %s38 = scalar_lea.vmem [#allocation0], 56
    %39 = vst [vmem:[%s38] sm:%s3] %v37
    %s40 = scalar_lea.vmem %s0, 24
    %v41 = vld [vmem:[%s40] sm:%s3]
    %s42 = scalar_lea.vmem [#allocation0], 48
    %43 = vst [vmem:[%s42] sm:%s3] %v41
    %s44 = scalar_lea.vmem %s0, 20
    %v45 = vld [vmem:[%s44] sm:%s3]
    %s46 = scalar_lea.vmem [#allocation0], 40
    %47 = vst [vmem:[%s46] sm:%s3] %v45
    %s48 = scalar_lea.vmem %s0, 16
    %v49 = vld [vmem:[%s48] sm:%s3]
    %s50 = scalar_lea.vmem [#allocation0], 32
    %51 = vst [vmem:[%s50] sm:%s3] %v49
    %s52 = scalar_lea.vmem %s0, 12
    %v53 = vld [vmem:[%s52] sm:%s3]
    %s54 = scalar_lea.vmem [#allocation0], 24
    %55 = vst [vmem:[%s54] sm:%s3] %v53
    %s56 = scalar_lea.vmem %s0, 8
    %v57 = vld [vmem:[%s56] sm:%s3]
    %s58 = scalar_lea.vmem [#allocation0], 16
    %59 = vst [vmem:[%s58] sm:%s3] %v57
    %s60 = scalar_lea.vmem %s0, 4
    %v61 = vld [vmem:[%s60] sm:%s3]
    %s62 = scalar_lea.vmem [#allocation0], 8
    %63 = vst [vmem:[%s62] sm:%s3] %v61
    %v64 = vld [vmem:[%s0] sm:%s3]
    %65 = vst [vmem:[#allocation0] sm:%s3] %v64
    %v66 = vld [vmem:[#allocation0] ss:$8 sm:$0xf]
    %v67 = vld [vmem:[#allocation0] ss:$8 sm:$0xf0]
    %vm68 = vcmask 1047556
    %v69 = vsel %vm68, %v67, %v66
    %vm70 = vcmask 130048
    %71 = vst.msk [vmem:[%s1] sm:$0xff] %vm70, %v69
    %s72 = scalar_lea.vmem [#allocation0], 64
    %v73 = vld [vmem:[%s72] ss:$8 sm:$0xf]
    %s74 = scalar_lea.vmem [#allocation0], 64
    %v75 = vld [vmem:[%s74] ss:$8 sm:$0xf0]
    %vm76 = vcmask 1047556
    %v77 = vsel %vm76, %v75, %v73
    %vm78 = vcmask 130048
    %s79 = scalar_lea.vmem %s1, 8
    %80 = vst.msk [vmem:[%s79] sm:$0xff] %vm78, %v77
    %s81 = scalar_lea.vmem [#allocation0], 3
    %v82 = vld [vmem:[%s81] ss:$8 sm:$0xf]
    %s83 = scalar_lea.vmem [#allocation0], 3
    %v84 = vld [vmem:[%s83] ss:$8 sm:$0xf0]
    %vm85 = vcmask 1047556
    %v86 = vsel %vm85, %v84, %v82
    %87 = vrot.lane.b32.xlu0 %v86, 48
    %v88 = vpop.permute.xlu0 %87
    %vm89 = vcmask 523648
    %90 = vst.msk [vmem:[%s1] sm:$0xff] %vm89, %v88
    %s91 = scalar_lea.vmem [#allocation0], 67
    %v92 = vld [vmem:[%s91] ss:$8 sm:$0xf]
    %s93 = scalar_lea.vmem [#allocation0], 67
    %v94 = vld [vmem:[%s93] ss:$8 sm:$0xf0]
    %vm95 = vcmask 1047556
    %v96 = vsel %vm95, %v94, %v92
    %97 = vrot.lane.b32.xlu0 %v96, 48
    %v98 = vpop.permute.xlu0 %97
    %vm99 = vcmask 523648
    %s100 = scalar_lea.vmem %s1, 8
    %101 = vst.msk [vmem:[%s100] sm:$0xff] %vm99, %v98
    %s102 = scalar_lea.vmem [#allocation0], 2
    %v103 = vld [vmem:[%s102] ss:$8 sm:$0xf]
    %s104 = scalar_lea.vmem [#allocation0], 2
    %v105 = vld [vmem:[%s104] ss:$8 sm:$0xf0]
    %vm106 = vcmask 1047556
    %v107 = vsel %vm106, %v105, %v103
    %108 = vrot.lane.b32.xlu0 %v107, 32
    %v109 = vpop.permute.xlu0 %108
    %vm110 = vcmask 392448
    %111 = vst.msk [vmem:[%s1] sm:$0xff] %vm110, %v109
    %s112 = scalar_lea.vmem [#allocation0], 66
    %v113 = vld [vmem:[%s112] ss:$8 sm:$0xf]
    %s114 = scalar_lea.vmem [#allocation0], 66
    %v115 = vld [vmem:[%s114] ss:$8 sm:$0xf0]
    %vm116 = vcmask 1047556
    %v117 = vsel %vm116, %v115, %v113
    %118 = vrot.lane.b32.xlu0 %v117, 32
    %v119 = vpop.permute.xlu0 %118
    %vm120 = vcmask 392448
    %s121 = scalar_lea.vmem %s1, 8
    %122 = vst.msk [vmem:[%s121] sm:$0xff] %vm120, %v119
    %s123 = scalar_lea.vmem [#allocation0], 1
    %v124 = vld [vmem:[%s123] ss:$8 sm:$0xf]
    %s125 = scalar_lea.vmem [#allocation0], 1
    %v126 = vld [vmem:[%s125] ss:$8 sm:$0xf0]
    %vm127 = vcmask 1047556
    %v128 = vsel %vm127, %v126, %v124
    %129 = vrot.lane.b32.xlu0 %v128, 16
    %v130 = vpop.permute.xlu0 %129
    %vm131 = vcmask 261248
    %132 = vst.msk [vmem:[%s1] sm:$0xff] %vm131, %v130
    %s133 = scalar_lea.vmem [#allocation0], 65
    %v134 = vld [vmem:[%s133] ss:$8 sm:$0xf]
    %s135 = scalar_lea.vmem [#allocation0], 65
    %v136 = vld [vmem:[%s135] ss:$8 sm:$0xf0]
    %vm137 = vcmask 1047556
    %v138 = vsel %vm137, %v136, %v134
    %139 = vrot.lane.b32.xlu0 %v138, 16
    %v140 = vpop.permute.xlu0 %139
    %vm141 = vcmask 261248
    %s142 = scalar_lea.vmem %s1, 8
    %143 = vst.msk [vmem:[%s142] sm:$0xff] %vm141, %v140

// kernel: mul.32
$region0: #{mul.32}
  %s0 = inlined_call_operand.vmem [shape: f32[2,16,16], index: 0, kind: input, shape index: {}]
  %s1 = inlined_call_operand.vmem [shape: f32[32,16], index: 1, kind: output, shape index: {}]
  $region1: #{mul.32} parent=0
    #allocation0 [shape = 'u8[65536]{0}', space=vmem, size = 0x10000, scoped, tag = 'scoped mem for input reshape']
    %s3 = ssub.s32 4, 1
    %s4 = scalar_lea.vmem %s0, 30
    %v5 = vld [vmem:[%s4] sm:%s3]
    %s6 = scalar_lea.vmem [#allocation0], 120
    %7 = vst [vmem:[%s6] sm:%s3] %v5
    %s8 = scalar_lea.vmem %s0, 28
    %v9 = vld [vmem:[%s8] sm:%s3]
    %s10 = scalar_lea.vmem [#allocation0], 112
    %11 = vst [vmem:[%s10] sm:%s3] %v9
    %s12 = scalar_lea.vmem %s0, 26
    %v13 = vld [vmem:[%s12] sm:%s3]
    %s14 = scalar_lea.vmem [#allocation0], 104
    %15 = vst [vmem:[%s14] sm:%s3] %v13
    %s16 = scalar_lea.vmem %s0, 24
    %v17 = vld [vmem:[%s16] sm:%s3]
    %s18 = scalar_lea.vmem [#allocation0], 96
    %19 = vst [vmem:[%s18] sm:%s3] %v17
    %s20 = scalar_lea.vmem %s0, 22
    %v21 = vld [vmem:[%s20] sm:%s3]
    %s22 = scalar_lea.vmem [#allocation0], 88
    %23 = vst [vmem:[%s22] sm:%s3] %v21
    %s24 = scalar_lea.vmem %s0, 20
    %v25 = vld [vmem:[%s24] sm:%s3]
    %s26 = scalar_lea.vmem [#allocation0], 80
    %27 = vst [vmem:[%s26] sm:%s3] %v25
    %s28 = scalar_lea.vmem %s0, 18
    %v29 = vld [vmem:[%s28] sm:%s3]
    %s30 = scalar_lea.vmem [#allocation0], 72
    %31 = vst [vmem:[%s30] sm:%s3] %v29
    %s32 = scalar_lea.vmem %s0, 16
    %v33 = vld [vmem:[%s32] sm:%s3]
    %s34 = scalar_lea.vmem [#allocation0], 64
    %35 = vst [vmem:[%s34] sm:%s3] %v33
    %s36 = scalar_lea.vmem %s0, 14
    %v37 = vld [vmem:[%s36] sm:%s3]
    %s38 = scalar_lea.vmem [#allocation0], 56
    %39 = vst [vmem:[%s38] sm:%s3] %v37
    %s40 = scalar_lea.vmem %s0, 12
    %v41 = vld [vmem:[%s40] sm:%s3]
    %s42 = scalar_lea.vmem [#allocation0], 48
    %43 = vst [vmem:[%s42] sm:%s3] %v41
    %s44 = scalar_lea.vmem %s0, 10
    %v45 = vld [vmem:[%s44] sm:%s3]
    %s46 = scalar_lea.vmem [#allocation0], 40
    %47 = vst [vmem:[%s46] sm:%s3] %v45
    %s48 = scalar_lea.vmem %s0, 8
    %v49 = vld [vmem:[%s48] sm:%s3]
    %s50 = scalar_lea.vmem [#allocation0], 32
    %51 = vst [vmem:[%s50] sm:%s3] %v49
    %s52 = scalar_lea.vmem %s0, 6
    %v53 = vld [vmem:[%s52] sm:%s3]
    %s54 = scalar_lea.vmem [#allocation0], 24
    %55 = vst [vmem:[%s54] sm:%s3] %v53
    %s56 = scalar_lea.vmem %s0, 4
    %v57 = vld [vmem:[%s56] sm:%s3]
    %s58 = scalar_lea.vmem [#allocation0], 16
    %59 = vst [vmem:[%s58] sm:%s3] %v57
    %s60 = scalar_lea.vmem %s0, 2
    %v61 = vld [vmem:[%s60] sm:%s3]
    %s62 = scalar_lea.vmem [#allocation0], 8
    %63 = vst [vmem:[%s62] sm:%s3] %v61
    %v64 = vld [vmem:[%s0] sm:%s3]
    %65 = vst [vmem:[#allocation0] sm:%s3] %v64
    %v66 = vld [vmem:[#allocation0] ss:$8 sm:$0xf]
    %v67 = vld [vmem:[#allocation0] ss:$8 sm:$0xf0]
    %vm68 = vcmask 1047556
    %v69 = vsel %vm68, %v67, %v66
    %vm70 = vcmask 130048
    %71 = vst.msk [vmem:[%s1] sm:$0xff] %vm70, %v69
    %s72 = scalar_lea.vmem [#allocation0], 64
    %v73 = vld [vmem:[%s72] ss:$8 sm:$0xf]
    %s74 = scalar_lea.vmem [#allocation0], 64
    %v75 = vld [vmem:[%s74] ss:$8 sm:$0xf0]
    %vm76 = vcmask 1047556
    %v77 = vsel %vm76, %v75, %v73
    %vm78 = vcmask 130048
    %s79 = scalar_lea.vmem %s1, 8
    %80 = vst.msk [vmem:[%s79] sm:$0xff] %vm78, %v77
    %s81 = scalar_lea.vmem [#allocation0], 1
    %v82 = vld [vmem:[%s81] ss:$8 sm:$0xf]
    %s83 = scalar_lea.vmem [#allocation0], 1
    %v84 = vld [vmem:[%s83] ss:$8 sm:$0xf0]
    %vm85 = vcmask 1047556
    %v86 = vsel %vm85, %v84, %v82
    %87 = vrot.lane.b32.xlu0 %v86, 16
    %v88 = vpop.permute.xlu0 %87
    %vm89 = vcmask 261248
    %90 = vst.msk [vmem:[%s1] sm:$0xff] %vm89, %v88
    %s91 = scalar_lea.vmem [#allocation0], 65
    %v92 = vld [vmem:[%s91] ss:$8 sm:$0xf]
    %s93 = scalar_lea.vmem [#allocation0], 65
    %v94 = vld [vmem:[%s93] ss:$8 sm:$0xf0]
    %vm95 = vcmask 1047556
    %v96 = vsel %vm95, %v94, %v92
    %97 = vrot.lane.b32.xlu0 %v96, 16
    %v98 = vpop.permute.xlu0 %97
    %vm99 = vcmask 261248
    %s100 = scalar_lea.vmem %s1, 8
    %101 = vst.msk [vmem:[%s100] sm:$0xff] %vm99, %v98

// kernel: tile.39
$region0: #{tile.39}
  #allocation0 [shape = 's32[1]{0}', space=sflag, size = 0x4, scoped, tag = 'scoped memory for tile.39']
  %s0 = inlined_call_operand.vmem [shape: f32[16], index: 0, kind: input, shape index: {}]
  %s1 = inlined_call_operand.vmem [shape: f32[16,16], index: 1, kind: output, shape index: {}]
  // Predicated region
  $region2: #{tile.39} parent=0 // pred_check
    _
  $region3: #{tile.39} parent=0 // pred_check_branch
    %3 = sbr.rel (0) target = $region5
  $region4: #{tile.39} parent=0 // pred_region
    _
  $region5: #{tile.39} parent=0 // pred_fallthru
    _
  %v4 = vld [vmem:[%s0] ss:$0 sm:$0xff]
  %5 = vst [vmem:[%s1] sm:$0xff] %v4
  %s6 = scalar_lea.vmem %s1, 8
  %7 = vst [vmem:[%s6] sm:$0xff] %v4

// kernel: tile.40
$region0: #{tile.40}
  %s0 = inlined_call_operand.vmem [shape: f32[16,16], index: 0, kind: input, shape index: {}]
  %s1 = inlined_call_operand.vmem [shape: f32[1,256], index: 1, kind: output, shape index: {}]
  $region1: #{tile.40} parent=0
    #allocation0 [shape = 'u8[8192]{0}', space=vmem, size = 0x2000, scoped, tag = 'scoped mem for output reshape']
    %s2 = smov 3
    %v3 = vld [vmem:[%s0] ss:$8 sm:%s2]
    %vm4 = vcmask 130048
    %5 = vst.msk [vmem:[#allocation0] ss:$8 sm:$0x3] %vm4, %v3
    %s6 = scalar_lea.vmem %s0, 7
    %s7 = smov 3
    %v8 = vld [vmem:[%s6] ss:$8 sm:%s7]
    %9 = vrot.lane.b32.xlu0 %v8, 112
    %v10 = vpop.permute.xlu0 %9
    %vm11 = vcmask 1048448
    %12 = vst.msk [vmem:[#allocation0] ss:$8 sm:$0x3] %vm11, %v10
    %s13 = scalar_lea.vmem %s0, 6
    %s14 = smov 3
    %v15 = vld [vmem:[%s13] ss:$8 sm:%s14]
    %16 = vrot.lane.b32.xlu0 %v15, 96
    %v17 = vpop.permute.xlu0 %16
    %vm18 = vcmask 917248
    %19 = vst.msk [vmem:[#allocation0] ss:$8 sm:$0x3] %vm18, %v17
    %s20 = scalar_lea.vmem %s0, 5
    %s21 = smov 3
    %v22 = vld [vmem:[%s20] ss:$8 sm:%s21]
    %23 = vrot.lane.b32.xlu0 %v22, 80
    %v24 = vpop.permute.xlu0 %23
    %vm25 = vcmask 786048
    %26 = vst.msk [vmem:[#allocation0] ss:$8 sm:$0x3] %vm25, %v24
    %s27 = scalar_lea.vmem %s0, 4
    %s28 = smov 3
    %v29 = vld [vmem:[%s27] ss:$8 sm:%s28]
    %30 = vrot.lane.b32.xlu0 %v29, 64
    %v31 = vpop.permute.xlu0 %30
    %vm32 = vcmask 654848
    %33 = vst.msk [vmem:[#allocation0] ss:$8 sm:$0x3] %vm32, %v31
    %s34 = scalar_lea.vmem %s0, 3
    %s35 = smov 3
    %v36 = vld [vmem:[%s34] ss:$8 sm:%s35]
    %37 = vrot.lane.b32.xlu0 %v36, 48
    %v38 = vpop.permute.xlu0 %37
    %vm39 = vcmask 523648
    %40 = vst.msk [vmem:[#allocation0] ss:$8 sm:$0x3] %vm39, %v38
    %s41 = scalar_lea.vmem %s0, 2
    %s42 = smov 3
    %v43 = vld [vmem:[%s41] ss:$8 sm:%s42]
    %44 = vrot.lane.b32.xlu0 %v43, 32
    %v45 = vpop.permute.xlu0 %44
    %vm46 = vcmask 392448
    %47 = vst.msk [vmem:[#allocation0] ss:$8 sm:$0x3] %vm46, %v45
    %s48 = scalar_lea.vmem %s0, 1
    %s49 = smov 3
    %v50 = vld [vmem:[%s48] ss:$8 sm:%s49]
    %51 = vrot.lane.b32.xlu0 %v50, 16
    %v52 = vpop.permute.xlu0 %51
    %vm53 = vcmask 261248
    %54 = vst.msk [vmem:[#allocation0] ss:$8 sm:$0x3] %vm53, %v52
    %s56 = ssub.s32 2, 1
    %v57 = vld [vmem:[#allocation0] sm:%s56]
    %s59 = ssub.s32 2, 1
    %60 = vst [vmem:[%s1] sm:%s59] %v57
    %s61 = scalar_lea.vmem [#allocation0], 8
    %v62 = vld [vmem:[%s61] sm:%s56]
    %s64 = ssub.s32 2, 1
    %s65 = scalar_lea.vmem %s1, 1
    %66 = vst [vmem:[%s65] sm:%s64] %v62

// kernel: tile.44
$region0: #{tile.44}
  #allocation0 [shape = 's32[1]{0}', space=sflag, size = 0x4, scoped, tag = 'scoped memory for tile.44']
  %s0 = inlined_call_operand.vmem [shape: f32[16], index: 0, kind: input, shape index: {}]
  %s1 = inlined_call_operand.vmem [shape: f32[4,16], index: 1, kind: output, shape index: {}]
  // Predicated region
  $region2: #{tile.44} parent=0 // pred_check
    _
  $region3: #{tile.44} parent=0 // pred_check_branch
    %3 = sbr.rel (0) target = $region5
  $region4: #{tile.44} parent=0 // pred_region
    _
  $region5: #{tile.44} parent=0 // pred_fallthru
    _
  %v4 = vld [vmem:[%s0] ss:$0 sm:$0xff]
  %5 = vst [vmem:[%s1] sm:$0xf] %v4

// kernel: tile.45
$region0: #{tile.45}
  %s0 = inlined_call_operand.vmem [shape: f32[4,16], index: 0, kind: input, shape index: {}]
  %s1 = inlined_call_operand.vmem [shape: f32[1,64], index: 1, kind: output, shape index: {}]
  $region1: #{tile.45} parent=0
    #allocation0 [shape = 'u8[4096]{0}', space=vmem, size = 0x1000, scoped, tag = 'scoped mem for output reshape']
    #allocation1 [shape = 'u8[4096]{0}', space=vmem, size = 0x1000, scoped, tag = 'scoped mem for input reshape']
    %s3 = ssub.s32 16, 1
    %v4 = vld [vmem:[%s0] sm:%s3]
    %5 = vst [vmem:[#allocation1] sm:%s3] %v4
    %v6 = vld [vmem:[#allocation1] sm:$0x1]
    %vm7 = vcmask 130048
    %8 = vst.msk [vmem:[#allocation0] sm:$0x1] %vm7, %v6
    %s9 = scalar_lea.vmem [#allocation1], 3
    %v10 = vld [vmem:[%s9] sm:$0x1]
    %11 = vrot.lane.b32.xlu0 %v10, 48
    %v12 = vpop.permute.xlu0 %11
    %vm13 = vcmask 523648
    %14 = vst.msk [vmem:[#allocation0] sm:$0x1] %vm13, %v12
    %s15 = scalar_lea.vmem [#allocation1], 2
    %v16 = vld [vmem:[%s15] sm:$0x1]
    %17 = vrot.lane.b32.xlu0 %v16, 32
    %v18 = vpop.permute.xlu0 %17
    %vm19 = vcmask 392448
    %20 = vst.msk [vmem:[#allocation0] sm:$0x1] %vm19, %v18
    %s21 = scalar_lea.vmem [#allocation1], 1
    %v22 = vld [vmem:[%s21] sm:$0x1]
    %23 = vrot.lane.b32.xlu0 %v22, 16
    %v24 = vpop.permute.xlu0 %23
    %vm25 = vcmask 261248
    %26 = vst.msk [vmem:[#allocation0] sm:$0x1] %vm25, %v24
    %s28 = ssub.s32 2, 1
    %v29 = vld [vmem:[#allocation0] sm:%s28]
    %s31 = ssub.s32 2, 1
    %32 = vst [vmem:[%s1] sm:%s31] %v29

// kernel: tile.49
$region0: #{tile.49}
  #allocation0 [shape = 's32[1]{0}', space=sflag, size = 0x4, scoped, tag = 'scoped memory for tile.49']
  %s0 = inlined_call_operand.vmem [shape: f32[16], index: 0, kind: input, shape index: {}]
  %s1 = inlined_call_operand.vmem [shape: f32[2,16], index: 1, kind: output, shape index: {}]
  // Predicated region
  $region2: #{tile.49} parent=0 // pred_check
    _
  $region3: #{tile.49} parent=0 // pred_check_branch
    %3 = sbr.rel (0) target = $region5
  $region4: #{tile.49} parent=0 // pred_region
    _
  $region5: #{tile.49} parent=0 // pred_fallthru
    _
  %v4 = vld [vmem:[%s0] ss:$0 sm:$0xff]
  %5 = vst [vmem:[%s1] sm:$0x3] %v4

// kernel: tile.50
$region0: #{tile.50}
  %s0 = inlined_call_operand.vmem [shape: f32[2,16], index: 0, kind: input, shape index: {}]
  %s1 = inlined_call_operand.vmem [shape: f32[1,32], index: 1, kind: output, shape index: {}]
  $region1: #{tile.50} parent=0
    #allocation0 [shape = 'u8[4096]{0}', space=vmem, size = 0x1000, scoped, tag = 'scoped mem for output reshape']
    #allocation1 [shape = 'u8[4096]{0}', space=vmem, size = 0x1000, scoped, tag = 'scoped mem for input reshape']
    %s3 = ssub.s32 4, 1
    %v4 = vld [vmem:[%s0] sm:%s3]
    %5 = vst [vmem:[#allocation1] sm:%s3] %v4
    %v6 = vld [vmem:[#allocation1] sm:$0x1]
    %vm7 = vcmask 130048
    %8 = vst.msk [vmem:[#allocation0] sm:$0x1] %vm7, %v6
    %s9 = scalar_lea.vmem [#allocation1], 1
    %v10 = vld [vmem:[%s9] sm:$0x1]
    %11 = vrot.lane.b32.xlu0 %v10, 16
    %v12 = vpop.permute.xlu0 %11
    %vm13 = vcmask 261248
    %14 = vst.msk [vmem:[#allocation0] sm:$0x1] %vm13, %v12
    %s16 = ssub.s32 2, 1
    %v17 = vld [vmem:[#allocation0] sm:%s16]
    %s19 = ssub.s32 2, 1
    %20 = vst [vmem:[%s1] sm:%s19] %v17

// kernel: mul.76
$region0: #{mul.76}
  %s0 = inlined_call_operand.vmem [shape: f32[16,4,16], index: 0, kind: input, shape index: {}]
  %s1 = inlined_call_operand.vmem [shape: f32[16,64], index: 1, kind: output, shape index: {}]
  $region1: #{mul.76} parent=0
    #allocation0 [shape = 'u8[65536]{0}', space=vmem, size = 0x10000, scoped, tag = 'scoped mem for input reshape']
    %s3 = ssub.s32 16, 1
    %s4 = scalar_lea.vmem %s0, 60
    %v5 = vld [vmem:[%s4] sm:%s3]
    %s6 = scalar_lea.vmem [#allocation0], 120
    %7 = vst [vmem:[%s6] sm:%s3] %v5
    %s8 = scalar_lea.vmem %s0, 56
    %v9 = vld [vmem:[%s8] sm:%s3]
    %s10 = scalar_lea.vmem [#allocation0], 112
    %11 = vst [vmem:[%s10] sm:%s3] %v9
    %s12 = scalar_lea.vmem %s0, 52
    %v13 = vld [vmem:[%s12] sm:%s3]
    %s14 = scalar_lea.vmem [#allocation0], 104
    %15 = vst [vmem:[%s14] sm:%s3] %v13
    %s16 = scalar_lea.vmem %s0, 48
    %v17 = vld [vmem:[%s16] sm:%s3]
    %s18 = scalar_lea.vmem [#allocation0], 96
    %19 = vst [vmem:[%s18] sm:%s3] %v17
    %s20 = scalar_lea.vmem %s0, 44
    %v21 = vld [vmem:[%s20] sm:%s3]
    %s22 = scalar_lea.vmem [#allocation0], 88
    %23 = vst [vmem:[%s22] sm:%s3] %v21
    %s24 = scalar_lea.vmem %s0, 40
    %v25 = vld [vmem:[%s24] sm:%s3]
    %s26 = scalar_lea.vmem [#allocation0], 80
    %27 = vst [vmem:[%s26] sm:%s3] %v25
    %s28 = scalar_lea.vmem %s0, 36
    %v29 = vld [vmem:[%s28] sm:%s3]
    %s30 = scalar_lea.vmem [#allocation0], 72
    %31 = vst [vmem:[%s30] sm:%s3] %v29
    %s32 = scalar_lea.vmem %s0, 32
    %v33 = vld [vmem:[%s32] sm:%s3]
    %s34 = scalar_lea.vmem [#allocation0], 64
    %35 = vst [vmem:[%s34] sm:%s3] %v33
    %s36 = scalar_lea.vmem %s0, 28
    %v37 = vld [vmem:[%s36] sm:%s3]
    %s38 = scalar_lea.vmem [#allocation0], 56
    %39 = vst [vmem:[%s38] sm:%s3] %v37
    %s40 = scalar_lea.vmem %s0, 24
    %v41 = vld [vmem:[%s40] sm:%s3]
    %s42 = scalar_lea.vmem [#allocation0], 48
    %43 = vst [vmem:[%s42] sm:%s3] %v41
    %s44 = scalar_lea.vmem %s0, 20
    %v45 = vld [vmem:[%s44] sm:%s3]
    %s46 = scalar_lea.vmem [#allocation0], 40
    %47 = vst [vmem:[%s46] sm:%s3] %v45
    %s48 = scalar_lea.vmem %s0, 16
    %v49 = vld [vmem:[%s48] sm:%s3]
    %s50 = scalar_lea.vmem [#allocation0], 32
    %51 = vst [vmem:[%s50] sm:%s3] %v49
    %s52 = scalar_lea.vmem %s0, 12
    %v53 = vld [vmem:[%s52] sm:%s3]
    %s54 = scalar_lea.vmem [#allocation0], 24
    %55 = vst [vmem:[%s54] sm:%s3] %v53
    %s56 = scalar_lea.vmem %s0, 8
    %v57 = vld [vmem:[%s56] sm:%s3]
    %s58 = scalar_lea.vmem [#allocation0], 16
    %59 = vst [vmem:[%s58] sm:%s3] %v57
    %s60 = scalar_lea.vmem %s0, 4
    %v61 = vld [vmem:[%s60] sm:%s3]
    %s62 = scalar_lea.vmem [#allocation0], 8
    %63 = vst [vmem:[%s62] sm:%s3] %v61
    %v64 = vld [vmem:[%s0] sm:%s3]
    %65 = vst [vmem:[#allocation0] sm:%s3] %v64
    %v66 = vld [vmem:[#allocation0] ss:$8 sm:$0xf]
    %v67 = vld [vmem:[#allocation0] ss:$8 sm:$0xf0]
    %vm68 = vcmask 1047556
    %v69 = vsel %vm68, %v67, %v66
    %vm70 = vcmask 130048
    %71 = vst.msk [vmem:[%s1] sm:$0xff] %vm70, %v69
    %s72 = scalar_lea.vmem [#allocation0], 64
    %v73 = vld [vmem:[%s72] ss:$8 sm:$0xf]
    %s74 = scalar_lea.vmem [#allocation0], 64
    %v75 = vld [vmem:[%s74] ss:$8 sm:$0xf0]
    %vm76 = vcmask 1047556
    %v77 = vsel %vm76, %v75, %v73
    %vm78 = vcmask 130048
    %s79 = scalar_lea.vmem %s1, 8
    %80 = vst.msk [vmem:[%s79] sm:$0xff] %vm78, %v77
    %s81 = scalar_lea.vmem [#allocation0], 3
    %v82 = vld [vmem:[%s81] ss:$8 sm:$0xf]
    %s83 = scalar_lea.vmem [#allocation0], 3
    %v84 = vld [vmem:[%s83] ss:$8 sm:$0xf0]
    %vm85 = vcmask 1047556
    %v86 = vsel %vm85, %v84, %v82
    %87 = vrot.lane.b32.xlu0 %v86, 48
    %v88 = vpop.permute.xlu0 %87
    %vm89 = vcmask 523648
    %90 = vst.msk [vmem:[%s1] sm:$0xff] %vm89, %v88
    %s91 = scalar_lea.vmem [#allocation0], 67
    %v92 = vld [vmem:[%s91] ss:$8 sm:$0xf]
    %s93 = scalar_lea.vmem [#allocation0], 67
    %v94 = vld [vmem:[%s93] ss:$8 sm:$0xf0]
    %vm95 = vcmask 1047556
    %v96 = vsel %vm95, %v94, %v92
    %97 = vrot.lane.b32.xlu0 %v96, 48
    %v98 = vpop.permute.xlu0 %97
    %vm99 = vcmask 523648
    %s100 = scalar_lea.vmem %s1, 8
    %101 = vst.msk [vmem:[%s100] sm:$0xff] %vm99, %v98
    %s102 = scalar_lea.vmem [#allocation0], 2
    %v103 = vld [vmem:[%s102] ss:$8 sm:$0xf]
    %s104 = scalar_lea.vmem [#allocation0], 2
    %v105 = vld [vmem:[%s104] ss:$8 sm:$0xf0]
    %vm106 = vcmask 1047556
    %v107 = vsel %vm106, %v105, %v103
    %108 = vrot.lane.b32.xlu0 %v107, 32
    %v109 = vpop.permute.xlu0 %108
    %vm110 = vcmask 392448
    %111 = vst.msk [vmem:[%s1] sm:$0xff] %vm110, %v109
    %s112 = scalar_lea.vmem [#allocation0], 66
    %v113 = vld [vmem:[%s112] ss:$8 sm:$0xf]
    %s114 = scalar_lea.vmem [#allocation0], 66
    %v115 = vld [vmem:[%s114] ss:$8 sm:$0xf0]
    %vm116 = vcmask 1047556
    %v117 = vsel %vm116, %v115, %v113
    %118 = vrot.lane.b32.xlu0 %v117, 32
    %v119 = vpop.permute.xlu0 %118
    %vm120 = vcmask 392448
    %s121 = scalar_lea.vmem %s1, 8
    %122 = vst.msk [vmem:[%s121] sm:$0xff] %vm120, %v119
    %s123 = scalar_lea.vmem [#allocation0], 1
    %v124 = vld [vmem:[%s123] ss:$8 sm:$0xf]
    %s125 = scalar_lea.vmem [#allocation0], 1
    %v126 = vld [vmem:[%s125] ss:$8 sm:$0xf0]
    %vm127 = vcmask 1047556
    %v128 = vsel %vm127, %v126, %v124
    %129 = vrot.lane.b32.xlu0 %v128, 16
    %v130 = vpop.permute.xlu0 %129
    %vm131 = vcmask 261248
    %132 = vst.msk [vmem:[%s1] sm:$0xff] %vm131, %v130
    %s133 = scalar_lea.vmem [#allocation0], 65
    %v134 = vld [vmem:[%s133] ss:$8 sm:$0xf]
    %s135 = scalar_lea.vmem [#allocation0], 65
    %v136 = vld [vmem:[%s135] ss:$8 sm:$0xf0]
    %vm137 = vcmask 1047556
    %v138 = vsel %vm137, %v136, %v134
    %139 = vrot.lane.b32.xlu0 %v138, 16
    %v140 = vpop.permute.xlu0 %139
    %vm141 = vcmask 261248
    %s142 = scalar_lea.vmem %s1, 8
    %143 = vst.msk [vmem:[%s142] sm:$0xff] %vm141, %v140

// kernel: forward.4
$region0: #{forward.4}
  #allocation0 [shape = 'u32[]', space=smem, size = 0x4, offset = 0x4, fixed_abs, tag = 'smem constant byte address 0x4 - core index']
  #allocation1 [shape = 'u32[72,128]{1,0:T(1,128)}', space=vmem, size = 0x9000, scoped, tag = 'internal scratch']
  %s0 = inlined_call_operand.vmem [shape: f32[8,8], index: 0, kind: input, shape index: {}]
  %s1 = inlined_call_operand.vmem [shape: f32[32,8], index: 1, kind: input, shape index: {}]
  %s2 = inlined_call_operand.vmem [shape: f32[1,32], index: 2, kind: input, shape index: {}]
  %s3 = inlined_call_operand.hbm [shape: s32[1,8], index: 3, kind: output, shape index: {0}]
  %s4 = inlined_call_operand.vmem [shape: f32[8,8], index: 4, kind: output, shape index: {1}]
  %s5 = inlined_call_operand.hbm [shape: f32[1,1], index: 5, kind: output, shape index: {2}]
  %6 = xla_tuple %s3, %s4, %s5
  %s7 = sld [smem:[#allocation0]]
  $region38: #{forward.4} parent=0
    _
  %s9 = ssub.s32 1, %s7
  %s10 = scalar_select 0, %s9, %s7
  $region1: #{forward.4} parent=0
    #allocation2 [shape = 'u8[512]{0}', space=vmem, size = 0x400, scoped, tag = 'output window, operand 0, single buffered']
    #allocation3 [shape = 's32[1]{0}', space=sflag, size = 0x4, scoped, tag = 'scoped memory for forward.4']
    #allocation4 [shape = 'u8[512]{0}', space=vmem, size = 0x400, scoped, tag = 'output window, operand 2, single buffered']
    #allocation5 [shape = 's32[1]{0}', space=sflag, size = 0x4, scoped, tag = 'scoped memory for forward.4']
    %11 = vsyncpa [#allocation3], 0
    %12 = vsyncpa [#allocation5], 0
    // Predicated region
    $region2: #{forward.4} parent=1 // pred_check
      _
    $region3: #{forward.4} parent=1 // pred_check_branch
      %14 = sbr.rel (0) target = $region5
    $region4: #{forward.4} parent=1 // pred_region
      _
    $region5: #{forward.4} parent=1 // pred_fallthru
      _
    // Predicated region
    $region6: #{forward.4} parent=1 // pred_check
      _
    $region7: #{forward.4} parent=1 // pred_check_branch
      %16 = sbr.rel (0) target = $region9
    $region8: #{forward.4} parent=1 // pred_region
      _
    $region9: #{forward.4} parent=1 // pred_fallthru
      _
    // Predicated region
    $region10: #{forward.4} parent=1 // pred_check
      _
    $region11: #{forward.4} parent=1 // pred_check_branch
      %18 = sbr.rel (0) target = $region13
    $region12: #{forward.4} parent=1 // pred_region
      _
    $region13: #{forward.4} parent=1 // pred_fallthru
      _
    %v19 = vld [vmem:[%s0] sm:$0xff]
    %v20 = vld [vmem:[%s1] sm:$0xff]
    %v21 = vld [vmem:[%s1 + $0x8] sm:$0xff]
    %v22 = vld [vmem:[%s1 + $0x10] sm:$0xff]
    %v23 = vld [vmem:[%s1 + $0x18] sm:$0xff]
    %v24 = vld [vmem:[%s2] sm:$0x1]
    %v26 = vperm.slane %v24, 0
    %vm28 = vcmask 64512
    %v30 = vsel %vm28, %v19, 0
    %v33 = vsel %vm28, %v20, 0
    %v36 = vsel %vm28, %v21, 0
    %v39 = vsel %vm28, %v22, 0
    %v42 = vsel %vm28, %v23, 0
    %44 = vmatpush.xpose.msra.mxu0 0.0
    %45 = vmatpush.xpose.msra.mxu0 0.0
    %46 = vmatpush.xpose.msra.mxu0 0.0
    %47 = vmatpush.xpose.msra.mxu0 0.0
    %48 = vmatpush.xpose.msra.mxu0 0.0
    %49 = vmatpush.xpose.msra.mxu0 0.0
    %50 = vmatpush.xpose.msra.mxu0 0.0
    %51 = vmatpush.xpose.msra.mxu0 0.0
    %52 = vmatpush.xpose.msra.mxu0 0.0
    %53 = vmatpush.xpose.msra.mxu0 0.0
    %54 = vmatpush.xpose.msra.mxu0 0.0
    %55 = vmatpush.xpose.msra.mxu0 0.0
    %56 = vmatpush.xpose.msra.mxu0 %v42
    %57 = vmatpush.xpose.msra.mxu0 %v39
    %58 = vmatpush.xpose.msra.mxu0 %v36
    %59 = vmatpush.xpose.msra.mxu0 %v33
    %60 = vmatmul.f32.gmra.mxu0 %v30
    %v61 = vpop.f32.mrf.mxu0
    %v62 = vadd.f32 %v26, %v61
    %63 = vdwg.mxu0
    %vm64 = vcmask 261120
    %v65 = vsel %vm64, %v62, -inf
    %66 = vmax.xlane.f32.xlu0 %v65
    %v67 = vpop.xlane.xlu0 %66
    %v68 = vlaneseq
    %v69 = vand.u32 %v68, 127
    %vm70 = vcmp.ge.f32.partialorder %v62, %v67
    %v71 = vsel %vm70, %v69, 32
    %v72 = vsel %vm64, %v71, 2147483647
    %v73 = vand.u32 %v72, 65535
    %v74 = vshra.s32 %v72, 16
    %v75 = vcvt.s32.f32 %v73
    %v76 = vcvt.s32.f32 %v74
    %77 = vmin.xlane.f32.xlu0 %v76
    %v78 = vpop.xlane.xlu0 %77
    %vm79 = vcmp.eq.f32.partialorder %v76, %v78
    %v80 = vsel %vm79, %v75, inf
    %81 = vmin.xlane.f32.xlu0 %v80
    %v82 = vpop.xlane.xlu0 %81
    %v83 = vcvt.f32.s32 %v82
    %v84 = vcvt.f32.s32 %v78
    %v85 = vshll.u32 %v84, 16
    %v86 = vadd.s32 %v85, %v83
    %vm87 = vcmp.eq.s32.totalorder %v69, %v86
    %v88 = vsel %vm87, 1, 0
    %v89 = vcvt.s32.f32 %v88
    %v91 = vsel %vm64, %v89, 0
    %93 = vmatpush.msra.mxu0 0.0
    %94 = vmatpush.msra.mxu0 0.0
    %95 = vmatpush.msra.mxu0 0.0
    %96 = vmatpush.msra.mxu0 0.0
    %97 = vmatpush.msra.mxu0 0.0
    %98 = vmatpush.msra.mxu0 0.0
    %99 = vmatpush.msra.mxu0 0.0
    %100 = vmatpush.msra.mxu0 0.0
    %101 = vmatpush.msra.mxu0 0.0
    %102 = vmatpush.msra.mxu0 0.0
    %103 = vmatpush.msra.mxu0 0.0
    %104 = vmatpush.msra.mxu0 0.0
    %105 = vmatpush.msra.mxu0 %v23
    %106 = vmatpush.msra.mxu0 %v22
    %107 = vmatpush.msra.mxu0 %v21
    %108 = vmatpush.msra.mxu0 %v20
    %109 = vmatmul.f32.gmra.mxu0 %v91
    %v110 = vpop.f32.mrf.mxu0
    %v111 = vadd.f32 0.0, %v110
    %112 = vdwg.mxu0
    %113 = vst.msk [vmem:[%s4] sm:$0xff] %vm28, %v111
    %v114 = vcvt.s32.f32 %v69
    %v116 = vsel %vm64, %v114, 0
    %118 = vmatpush.xpose.msra.mxu0 0.0
    %119 = vmatpush.xpose.msra.mxu0 0.0
    %120 = vmatpush.xpose.msra.mxu0 0.0
    %121 = vmatpush.xpose.msra.mxu0 0.0
    %122 = vmatpush.xpose.msra.mxu0 0.0
    %123 = vmatpush.xpose.msra.mxu0 0.0
    %124 = vmatpush.xpose.msra.mxu0 0.0
    %125 = vmatpush.xpose.msra.mxu0 0.0
    %126 = vmatpush.xpose.msra.mxu0 0.0
    %127 = vmatpush.xpose.msra.mxu0 0.0
    %128 = vmatpush.xpose.msra.mxu0 0.0
    %129 = vmatpush.xpose.msra.mxu0 0.0
    %130 = vmatpush.xpose.msra.mxu0 0.0
    %131 = vmatpush.xpose.msra.mxu0 0.0
    %132 = vmatpush.xpose.msra.mxu0 0.0
    %133 = vmatpush.xpose.msra.mxu0 %v91
    %134 = vmatmul.f32.gmra.mxu0 %v116
    %v135 = vpop.f32.mrf.mxu0
    %v136 = vadd.f32 0.0, %v135
    %137 = vdwg.mxu0
    %v138 = vcvt.f32.s32.to.zero.pseudo %v136
    %vm139 = vcmask 57344
    %140 = vst.msk [vmem:[#allocation2] sm:$0x1] %vm139, %v138
    %v141 = vsub.f32 %v111, %v19
    %v142 = vmul.f32 %v141, %v141
    %v143 = vsel %vm28, %v142, 0.0
    %144 = vadd.xlane.f32.xlu0 %v143
    %v145 = vpop.xlane.xlu0 %144
    %v146 = vrot.slane %v145, 4
    %v147 = vadd.f32 %v145, %v146
    %v148 = vrot.slane %v147, 2
    %v149 = vadd.f32 %v147, %v148
    %v150 = vrot.slane %v149, 1
    %v151 = vadd.f32 %v149, %v150
    %v152 = vmul.f32 %v151, 0.01953125
    %vm153 = vcmask 0
    %154 = vst.msk [vmem:[#allocation4] sm:$0x1] %vm153, %v152
    // Predicated region
    $region14: #{forward.4} parent=1 // pred_check
      _
    $region15: #{forward.4} parent=1 // pred_check_branch
      %156 = sbr.rel (0) target = $region17
    $region16: #{forward.4} parent=1 // pred_region
      %158 = vsyncadd [#allocation3], 0
      %s160 = sshll.u32 [#allocation2], 4
      %s161 = int_to_ptr.vmem [resolvable:$true] %s160
      %s162 = sshll.u32 %s3, 4
      %s163 = int_to_ptr.hbm [resolvable:$true] %s162
      %165 = dma.vmem_to_hbm [thread:$0]  %s161, 16, %s163, [#allocation3]
    $region17: #{forward.4} parent=1 // pred_fallthru
      _
    // Predicated region
    $region18: #{forward.4} parent=1 // pred_check
      _
    $region19: #{forward.4} parent=1 // pred_check_branch
      %167 = sbr.rel (0) target = $region21
    $region20: #{forward.4} parent=1 // pred_region
      _
    $region21: #{forward.4} parent=1 // pred_fallthru
      _
    // Predicated region
    $region22: #{forward.4} parent=1 // pred_check
      _
    $region23: #{forward.4} parent=1 // pred_check_branch
      %169 = sbr.rel (0) target = $region25
    $region24: #{forward.4} parent=1 // pred_region
      %171 = vsyncadd [#allocation5], 0
      %s173 = sshll.u32 [#allocation4], 4
      %s174 = int_to_ptr.vmem [resolvable:$true] %s173
      %s175 = sshll.u32 %s5, 4
      %s176 = int_to_ptr.hbm [resolvable:$true] %s175
      %178 = dma.vmem_to_hbm [thread:$0]  %s174, 16, %s176, [#allocation5]
    $region25: #{forward.4} parent=1 // pred_fallthru
      _
    // Predicated region
    $region26: #{forward.4} parent=1 // pred_check
      _
    $region27: #{forward.4} parent=1 // pred_check_branch
      %180 = sbr.rel (0) target = $region29
    $region28: #{forward.4} parent=1 // pred_region
      %182 = dma.done [#allocation3], 16
    $region29: #{forward.4} parent=1 // pred_fallthru
      _
    // Predicated region
    $region30: #{forward.4} parent=1 // pred_check
      _
    $region31: #{forward.4} parent=1 // pred_check_branch
      %184 = sbr.rel (0) target = $region33
    $region32: #{forward.4} parent=1 // pred_region
      _
    $region33: #{forward.4} parent=1 // pred_fallthru
      _
    // Predicated region
    $region34: #{forward.4} parent=1 // pred_check
      _
    $region35: #{forward.4} parent=1 // pred_check_branch
      %186 = sbr.rel (0) target = $region37
    $region36: #{forward.4} parent=1 // pred_region
      %188 = dma.done [#allocation5], 16
    $region37: #{forward.4} parent=1 // pred_fallthru
      _
    %189 = vsyncpa [#allocation3], 1
    %190 = vsyncpa [#allocation5], 1

// kernel: mul.62
$region0: #{mul.62}
  %s0 = inlined_call_operand.vmem [shape: f32[16,2,16], index: 0, kind: input, shape index: {}]
  %s1 = inlined_call_operand.vmem [shape: f32[16,32], index: 1, kind: output, shape index: {}]
  $region1: #{mul.62} parent=0
    #allocation0 [shape = 'u8[65536]{0}', space=vmem, size = 0x10000, scoped, tag = 'scoped mem for input reshape']
    %s3 = ssub.s32 4, 1
    %s4 = scalar_lea.vmem %s0, 30
    %v5 = vld [vmem:[%s4] sm:%s3]
    %s6 = scalar_lea.vmem [#allocation0], 120
    %7 = vst [vmem:[%s6] sm:%s3] %v5
    %s8 = scalar_lea.vmem %s0, 28
    %v9 = vld [vmem:[%s8] sm:%s3]
    %s10 = scalar_lea.vmem [#allocation0], 112
    %11 = vst [vmem:[%s10] sm:%s3] %v9
    %s12 = scalar_lea.vmem %s0, 26
    %v13 = vld [vmem:[%s12] sm:%s3]
    %s14 = scalar_lea.vmem [#allocation0], 104
    %15 = vst [vmem:[%s14] sm:%s3] %v13
    %s16 = scalar_lea.vmem %s0, 24
    %v17 = vld [vmem:[%s16] sm:%s3]
    %s18 = scalar_lea.vmem [#allocation0], 96
    %19 = vst [vmem:[%s18] sm:%s3] %v17
    %s20 = scalar_lea.vmem %s0, 22
    %v21 = vld [vmem:[%s20] sm:%s3]
    %s22 = scalar_lea.vmem [#allocation0], 88
    %23 = vst [vmem:[%s22] sm:%s3] %v21
    %s24 = scalar_lea.vmem %s0, 20
    %v25 = vld [vmem:[%s24] sm:%s3]
    %s26 = scalar_lea.vmem [#allocation0], 80
    %27 = vst [vmem:[%s26] sm:%s3] %v25
    %s28 = scalar_lea.vmem %s0, 18
    %v29 = vld [vmem:[%s28] sm:%s3]
    %s30 = scalar_lea.vmem [#allocation0], 72
    %31 = vst [vmem:[%s30] sm:%s3] %v29
    %s32 = scalar_lea.vmem %s0, 16
    %v33 = vld [vmem:[%s32] sm:%s3]
    %s34 = scalar_lea.vmem [#allocation0], 64
    %35 = vst [vmem:[%s34] sm:%s3] %v33
    %s36 = scalar_lea.vmem %s0, 14
    %v37 = vld [vmem:[%s36] sm:%s3]
    %s38 = scalar_lea.vmem [#allocation0], 56
    %39 = vst [vmem:[%s38] sm:%s3] %v37
    %s40 = scalar_lea.vmem %s0, 12
    %v41 = vld [vmem:[%s40] sm:%s3]
    %s42 = scalar_lea.vmem [#allocation0], 48
    %43 = vst [vmem:[%s42] sm:%s3] %v41
    %s44 = scalar_lea.vmem %s0, 10
    %v45 = vld [vmem:[%s44] sm:%s3]
    %s46 = scalar_lea.vmem [#allocation0], 40
    %47 = vst [vmem:[%s46] sm:%s3] %v45
    %s48 = scalar_lea.vmem %s0, 8
    %v49 = vld [vmem:[%s48] sm:%s3]
    %s50 = scalar_lea.vmem [#allocation0], 32
    %51 = vst [vmem:[%s50] sm:%s3] %v49
    %s52 = scalar_lea.vmem %s0, 6
    %v53 = vld [vmem:[%s52] sm:%s3]
    %s54 = scalar_lea.vmem [#allocation0], 24
    %55 = vst [vmem:[%s54] sm:%s3] %v53
    %s56 = scalar_lea.vmem %s0, 4
    %v57 = vld [vmem:[%s56] sm:%s3]
    %s58 = scalar_lea.vmem [#allocation0], 16
    %59 = vst [vmem:[%s58] sm:%s3] %v57
    %s60 = scalar_lea.vmem %s0, 2
    %v61 = vld [vmem:[%s60] sm:%s3]
    %s62 = scalar_lea.vmem [#allocation0], 8
    %63 = vst [vmem:[%s62] sm:%s3] %v61
    %v64 = vld [vmem:[%s0] sm:%s3]
    %65 = vst [vmem:[#allocation0] sm:%s3] %v64
    %v66 = vld [vmem:[#allocation0] ss:$8 sm:$0xf]
    %v67 = vld [vmem:[#allocation0] ss:$8 sm:$0xf0]
    %vm68 = vcmask 1047556
    %v69 = vsel %vm68, %v67, %v66
    %vm70 = vcmask 130048
    %71 = vst.msk [vmem:[%s1] sm:$0xff] %vm70, %v69
    %s72 = scalar_lea.vmem [#allocation0], 64
    %v73 = vld [vmem:[%s72] ss:$8 sm:$0xf]
    %s74 = scalar_lea.vmem [#allocation0], 64
    %v75 = vld [vmem:[%s74] ss:$8 sm:$0xf0]
    %vm76 = vcmask 1047556
    %v77 = vsel %vm76, %v75, %v73
    %vm78 = vcmask 130048
    %s79 = scalar_lea.vmem %s1, 8
    %80 = vst.msk [vmem:[%s79] sm:$0xff] %vm78, %v77
    %s81 = scalar_lea.vmem [#allocation0], 1
    %v82 = vld [vmem:[%s81] ss:$8 sm:$0xf]
    %s83 = scalar_lea.vmem [#allocation0], 1
    %v84 = vld [vmem:[%s83] ss:$8 sm:$0xf0]
    %vm85 = vcmask 1047556
    %v86 = vsel %vm85, %v84, %v82
    %87 = vrot.lane.b32.xlu0 %v86, 16
    %v88 = vpop.permute.xlu0 %87
    %vm89 = vcmask 261248
    %90 = vst.msk [vmem:[%s1] sm:$0xff] %vm89, %v88
    %s91 = scalar_lea.vmem [#allocation0], 65
    %v92 = vld [vmem:[%s91] ss:$8 sm:$0xf]
    %s93 = scalar_lea.vmem [#allocation0], 65
    %v94 = vld [vmem:[%s93] ss:$8 sm:$0xf0]
    %vm95 = vcmask 1047556
    %v96 = vsel %vm95, %v94, %v92
    %97 = vrot.lane.b32.xlu0 %v96, 16
    %v98 = vpop.permute.xlu0 %97
    %vm99 = vcmask 261248
    %s100 = scalar_lea.vmem %s1, 8
    %101 = vst.msk [vmem:[%s100] sm:$0xff] %vm99, %v98

// kernel: forward.3
$region0: #{forward.3}
  #allocation0 [shape = 'u32[]', space=smem, size = 0x4, offset = 0x4, fixed_abs, tag = 'smem constant byte address 0x4 - core index']
  #allocation1 [shape = 'u32[72,128]{1,0:T(1,128)}', space=vmem, size = 0x9000, scoped, tag = 'internal scratch']
  %s0 = inlined_call_operand.vmem [shape: f32[8,64], index: 0, kind: input, shape index: {}]
  %s1 = inlined_call_operand.vmem [shape: f32[64,256], index: 1, kind: input, shape index: {}]
  %s2 = inlined_call_operand.vmem [shape: f32[1,256], index: 2, kind: input, shape index: {}]
  %s3 = inlined_call_operand.vmem [shape: f32[256,64], index: 3, kind: input, shape index: {}]
  %s4 = inlined_call_operand.vmem [shape: f32[1,64], index: 4, kind: input, shape index: {}]
  %s5 = inlined_call_operand.vmem [shape: f32[64,32], index: 5, kind: input, shape index: {}]
  %s6 = inlined_call_operand.vmem [shape: f32[1,32], index: 6, kind: input, shape index: {}]
  %s7 = inlined_call_operand.vmem [shape: f32[32,8], index: 7, kind: input, shape index: {}]
  %s8 = inlined_call_operand.vmem [shape: f32[1,8], index: 8, kind: input, shape index: {}]
  %s9 = inlined_call_operand.vmem [shape: f32[8,8], index: 9, kind: output, shape index: {}]
  %s10 = sld [smem:[#allocation0]]
  $region46: #{forward.3} parent=0
    _
  %s12 = ssub.s32 1, %s10
  %s13 = scalar_select 0, %s12, %s10
  // Predicated region
  $region2: #{forward.3} parent=0 // pred_check
    _
  $region3: #{forward.3} parent=0 // pred_check_branch
    %15 = sbr.rel (0) target = $region5
  $region4: #{forward.3} parent=0 // pred_region
    _
  $region5: #{forward.3} parent=0 // pred_fallthru
    _
  // Predicated region
  $region6: #{forward.3} parent=0 // pred_check
    _
  $region7: #{forward.3} parent=0 // pred_check_branch
    %17 = sbr.rel (0) target = $region9
  $region8: #{forward.3} parent=0 // pred_region
    _
  $region9: #{forward.3} parent=0 // pred_fallthru
    _
  // Predicated region
  $region10: #{forward.3} parent=0 // pred_check
    _
  $region11: #{forward.3} parent=0 // pred_check_branch
    %19 = sbr.rel (0) target = $region13
  $region12: #{forward.3} parent=0 // pred_region
    _
  $region13: #{forward.3} parent=0 // pred_fallthru
    _
  // Predicated region
  $region14: #{forward.3} parent=0 // pred_check
    _
  $region15: #{forward.3} parent=0 // pred_check_branch
    %21 = sbr.rel (0) target = $region17
  $region16: #{forward.3} parent=0 // pred_region
    _
  $region17: #{forward.3} parent=0 // pred_fallthru
    _
  // Predicated region
  $region18: #{forward.3} parent=0 // pred_check
    _
  $region19: #{forward.3} parent=0 // pred_check_branch
    %23 = sbr.rel (0) target = $region21
  $region20: #{forward.3} parent=0 // pred_region
    _
  $region21: #{forward.3} parent=0 // pred_fallthru
    _
  // Predicated region
  $region22: #{forward.3} parent=0 // pred_check
    _
  $region23: #{forward.3} parent=0 // pred_check_branch
    %25 = sbr.rel (0) target = $region25
  $region24: #{forward.3} parent=0 // pred_region
    _
  $region25: #{forward.3} parent=0 // pred_fallthru
    _
  // Predicated region
  $region26: #{forward.3} parent=0 // pred_check
    _
  $region27: #{forward.3} parent=0 // pred_check_branch
    %27 = sbr.rel (0) target = $region29
  $region28: #{forward.3} parent=0 // pred_region
    _
  $region29: #{forward.3} parent=0 // pred_fallthru
    _
  // Predicated region
  $region30: #{forward.3} parent=0 // pred_check
    _
  $region31: #{forward.3} parent=0 // pred_check_branch
    %29 = sbr.rel (0) target = $region33
  $region32: #{forward.3} parent=0 // pred_region
    _
  $region33: #{forward.3} parent=0 // pred_fallthru
    _
  // Predicated region
  $region34: #{forward.3} parent=0 // pred_check
    _
  $region35: #{forward.3} parent=0 // pred_check_branch
    %31 = sbr.rel (0) target = $region37
  $region36: #{forward.3} parent=0 // pred_region
    _
  $region37: #{forward.3} parent=0 // pred_fallthru
    _
  %v32 = vld [vmem:[%s0] sm:$0xff]
  %v33 = vld [vmem:[%s1] sm:$0xff]
  %v34 = vld [vmem:[%s1 + $0x8] sm:$0xff]
  %v35 = vld [vmem:[%s1 + $0x10] sm:$0xff]
  %v36 = vld [vmem:[%s1 + $0x18] sm:$0xff]
  %v37 = vld [vmem:[%s1 + $0x20] sm:$0xff]
  %v38 = vld [vmem:[%s1 + $0x28] sm:$0xff]
  %v39 = vld [vmem:[%s1 + $0x30] sm:$0xff]
  %v40 = vld [vmem:[%s1 + $0x38] sm:$0xff]
  %v41 = vld [vmem:[%s1 + $0x40] sm:$0xff]
  %v42 = vld [vmem:[%s1 + $0x48] sm:$0xff]
  %v43 = vld [vmem:[%s1 + $0x50] sm:$0xff]
  %v44 = vld [vmem:[%s1 + $0x58] sm:$0xff]
  %v45 = vld [vmem:[%s1 + $0x60] sm:$0xff]
  %v46 = vld [vmem:[%s1 + $0x68] sm:$0xff]
  %v47 = vld [vmem:[%s1 + $0x70] sm:$0xff]
  %v48 = vld [vmem:[%s1 + $0x78] sm:$0xff]
  %v49 = vld [vmem:[%s2] sm:$0x3]
  %v51 = vperm.slane %v49, 0
  %v52 = vperm.slane %v49, 1
  %vm55 = vcmask 523264
  %v57 = vsel %vm55, %v32, 0
  %59 = vmatpush.msra.mxu0 0.0
  %60 = vmatpush.msra.mxu0 0.0
  %61 = vmatpush.msra.mxu0 0.0
  %62 = vmatpush.msra.mxu0 0.0
  %63 = vmatpush.msra.mxu0 0.0
  %64 = vmatpush.msra.mxu0 0.0
  %65 = vmatpush.msra.mxu0 0.0
  %66 = vmatpush.msra.mxu0 0.0
  %67 = vmatpush.msra.mxu0 %v47
  %68 = vmatpush.msra.mxu0 %v45
  %69 = vmatpush.msra.mxu0 %v43
  %70 = vmatpush.msra.mxu0 %v41
  %71 = vmatpush.msra.mxu0 %v39
  %72 = vmatpush.msra.mxu0 %v37
  %73 = vmatpush.msra.mxu0 %v35
  %74 = vmatpush.msra.mxu0 %v33
  %75 = vmatmul.f32.gmra.mxu0 %v57
  %v76 = vpop.f32.mrf.mxu0
  %v77 = vadd.f32 %v51, %v76
  %78 = vdwg.mxu0
  %79 = vmatpush.msra.mxu0 0.0
  %80 = vmatpush.msra.mxu0 0.0
  %81 = vmatpush.msra.mxu0 0.0
  %82 = vmatpush.msra.mxu0 0.0
  %83 = vmatpush.msra.mxu0 0.0
  %84 = vmatpush.msra.mxu0 0.0
  %85 = vmatpush.msra.mxu0 0.0
  %86 = vmatpush.msra.mxu0 0.0
  %87 = vmatpush.msra.mxu0 %v48
  %88 = vmatpush.msra.mxu0 %v46
  %89 = vmatpush.msra.mxu0 %v44
  %90 = vmatpush.msra.mxu0 %v42
  %91 = vmatpush.msra.mxu0 %v40
  %92 = vmatpush.msra.mxu0 %v38
  %93 = vmatpush.msra.mxu0 %v36
  %94 = vmatpush.msra.mxu0 %v34
  %95 = vmatmul.f32.gmra.mxu0 %v57
  %v96 = vpop.f32.mrf.mxu0
  %v97 = vadd.f32 %v52, %v96
  %98 = vdwg.mxu0
  %v99 = vmax.f32 %v77, 0.0
  %v100 = vmax.f32 %v97, 0.0
  %v101 = vld [vmem:[%s3] sm:$0xff]
  %v102 = vld [vmem:[%s3 + $0x8] sm:$0xff]
  %v103 = vld [vmem:[%s3 + $0x10] sm:$0xff]
  %v104 = vld [vmem:[%s3 + $0x18] sm:$0xff]
  %v105 = vld [vmem:[%s3 + $0x20] sm:$0xff]
  %v106 = vld [vmem:[%s3 + $0x28] sm:$0xff]
  %v107 = vld [vmem:[%s3 + $0x30] sm:$0xff]
  %v108 = vld [vmem:[%s3 + $0x38] sm:$0xff]
  %v109 = vld [vmem:[%s3 + $0x40] sm:$0xff]
  %v110 = vld [vmem:[%s3 + $0x48] sm:$0xff]
  %v111 = vld [vmem:[%s3 + $0x50] sm:$0xff]
  %v112 = vld [vmem:[%s3 + $0x58] sm:$0xff]
  %v113 = vld [vmem:[%s3 + $0x60] sm:$0xff]
  %v114 = vld [vmem:[%s3 + $0x68] sm:$0xff]
  %v115 = vld [vmem:[%s3 + $0x70] sm:$0xff]
  %v116 = vld [vmem:[%s3 + $0x78] sm:$0xff]
  %v117 = vld [vmem:[%s3 + $0x80] sm:$0xff]
  %v118 = vld [vmem:[%s3 + $0x88] sm:$0xff]
  %v119 = vld [vmem:[%s3 + $0x90] sm:$0xff]
  %v120 = vld [vmem:[%s3 + $0x98] sm:$0xff]
  %v121 = vld [vmem:[%s3 + $0xa0] sm:$0xff]
  %v122 = vld [vmem:[%s3 + $0xa8] sm:$0xff]
  %v123 = vld [vmem:[%s3 + $0xb0] sm:$0xff]
  %v124 = vld [vmem:[%s3 + $0xb8] sm:$0xff]
  %v125 = vld [vmem:[%s3 + $0xc0] sm:$0xff]
  %v126 = vld [vmem:[%s3 + $0xc8] sm:$0xff]
  %v127 = vld [vmem:[%s3 + $0xd0] sm:$0xff]
  %v128 = vld [vmem:[%s3 + $0xd8] sm:$0xff]
  %v129 = vld [vmem:[%s3 + $0xe0] sm:$0xff]
  %v130 = vld [vmem:[%s3 + $0xe8] sm:$0xff]
  %v131 = vld [vmem:[%s3 + $0xf0] sm:$0xff]
  %v132 = vld [vmem:[%s3 + $0xf8] sm:$0xff]
  %v133 = vld [vmem:[%s4] sm:$0x1]
  %v135 = vperm.slane %v133, 0
  %137 = vmatpush.msra.mxu0 %v116
  %138 = vmatpush.msra.mxu0 %v115
  %139 = vmatpush.msra.mxu0 %v114
  %140 = vmatpush.msra.mxu0 %v113
  %141 = vmatpush.msra.mxu0 %v112
  %142 = vmatpush.msra.mxu0 %v111
  %143 = vmatpush.msra.mxu0 %v110
  %144 = vmatpush.msra.mxu0 %v109
  %145 = vmatpush.msra.mxu0 %v108
  %146 = vmatpush.msra.mxu0 %v107
  %147 = vmatpush.msra.mxu0 %v106
  %148 = vmatpush.msra.mxu0 %v105
  %149 = vmatpush.msra.mxu0 %v104
  %150 = vmatpush.msra.mxu0 %v103
  %151 = vmatpush.msra.mxu0 %v102
  %152 = vmatpush.msra.mxu0 %v101
  %153 = vmatmul.f32.gmra.mxu0 %v99
  %v154 = vpop.f32.mrf.mxu0
  %v155 = vadd.f32 %v135, %v154
  %156 = vdwg.mxu0
  %157 = vmatpush.msra.mxu0 %v132
  %158 = vmatpush.msra.mxu0 %v131
  %159 = vmatpush.msra.mxu0 %v130
  %160 = vmatpush.msra.mxu0 %v129
  %161 = vmatpush.msra.mxu0 %v128
  %162 = vmatpush.msra.mxu0 %v127
  %163 = vmatpush.msra.mxu0 %v126
  %164 = vmatpush.msra.mxu0 %v125
  %165 = vmatpush.msra.mxu0 %v124
  %166 = vmatpush.msra.mxu0 %v123
  %167 = vmatpush.msra.mxu0 %v122
  %168 = vmatpush.msra.mxu0 %v121
  %169 = vmatpush.msra.mxu0 %v120
  %170 = vmatpush.msra.mxu0 %v119
  %171 = vmatpush.msra.mxu0 %v118
  %172 = vmatpush.msra.mxu0 %v117
  %173 = vmatmul.f32.gmra.mxu0 %v100
  %v174 = vpop.f32.mrf.mxu0
  %v175 = vadd.f32 %v155, %v174
  %176 = vdwg.mxu0
  %v177 = vmax.f32 %v175, 0.0
  %v178 = vld [vmem:[%s5] sm:$0xff]
  %v179 = vld [vmem:[%s5 + $0x8] sm:$0xff]
  %v180 = vld [vmem:[%s5 + $0x10] sm:$0xff]
  %v181 = vld [vmem:[%s5 + $0x18] sm:$0xff]
  %v182 = vld [vmem:[%s5 + $0x20] sm:$0xff]
  %v183 = vld [vmem:[%s5 + $0x28] sm:$0xff]
  %v184 = vld [vmem:[%s5 + $0x30] sm:$0xff]
  %v185 = vld [vmem:[%s5 + $0x38] sm:$0xff]
  %v186 = vld [vmem:[%s6] sm:$0x1]
  %v188 = vperm.slane %v186, 0
  %v191 = vsel %vm55, %v177, 0
  %193 = vmatpush.msra.mxu0 0.0
  %194 = vmatpush.msra.mxu0 0.0
  %195 = vmatpush.msra.mxu0 0.0
  %196 = vmatpush.msra.mxu0 0.0
  %197 = vmatpush.msra.mxu0 0.0
  %198 = vmatpush.msra.mxu0 0.0
  %199 = vmatpush.msra.mxu0 0.0
  %200 = vmatpush.msra.mxu0 0.0
  %201 = vmatpush.msra.mxu0 %v185
  %202 = vmatpush.msra.mxu0 %v184
  %203 = vmatpush.msra.mxu0 %v183
  %204 = vmatpush.msra.mxu0 %v182
  %205 = vmatpush.msra.mxu0 %v181
  %206 = vmatpush.msra.mxu0 %v180
  %207 = vmatpush.msra.mxu0 %v179
  %208 = vmatpush.msra.mxu0 %v178
  %209 = vmatmul.f32.gmra.mxu0 %v191
  %v210 = vpop.f32.mrf.mxu0
  %v211 = vadd.f32 %v188, %v210
  %212 = vdwg.mxu0
  %v213 = vmax.f32 %v211, 0.0
  %v214 = vld [vmem:[%s7] sm:$0xff]
  %v215 = vld [vmem:[%s7 + $0x8] sm:$0xff]
  %v216 = vld [vmem:[%s7 + $0x10] sm:$0xff]
  %v217 = vld [vmem:[%s7 + $0x18] sm:$0xff]
  %v218 = vld [vmem:[%s8] sm:$0x1]
  %v220 = vperm.slane %v218, 0
  %vm222 = vcmask 261120
  %v224 = vsel %vm222, %v213, 0
  %226 = vmatpush.msra.mxu0 0.0
  %227 = vmatpush.msra.mxu0 0.0
  %228 = vmatpush.msra.mxu0 0.0
  %229 = vmatpush.msra.mxu0 0.0
  %230 = vmatpush.msra.mxu0 0.0
  %231 = vmatpush.msra.mxu0 0.0
  %232 = vmatpush.msra.mxu0 0.0
  %233 = vmatpush.msra.mxu0 0.0
  %234 = vmatpush.msra.mxu0 0.0
  %235 = vmatpush.msra.mxu0 0.0
  %236 = vmatpush.msra.mxu0 0.0
  %237 = vmatpush.msra.mxu0 0.0
  %238 = vmatpush.msra.mxu0 %v217
  %239 = vmatpush.msra.mxu0 %v216
  %240 = vmatpush.msra.mxu0 %v215
  %241 = vmatpush.msra.mxu0 %v214
  %242 = vmatmul.f32.gmra.mxu0 %v224
  %v243 = vpop.f32.mrf.mxu0
  %v244 = vadd.f32 %v220, %v243
  %245 = vdwg.mxu0
  %v246 = vmax.f32 %v244, 0.0
  %vm247 = vcmask 64512
  %248 = vst.msk [vmem:[%s9] sm:$0xff] %vm247, %v246
  // Predicated region
  $region38: #{forward.3} parent=0 // pred_check
    _
  $region39: #{forward.3} parent=0 // pred_check_branch
    %250 = sbr.rel (0) target = $region41
  $region40: #{forward.3} parent=0 // pred_region
    _
  $region41: #{forward.3} parent=0 // pred_fallthru
    _
  // Predicated region
  $region42: #{forward.3} parent=0 // pred_check
    _
  $region43: #{forward.3} parent=0 // pred_check_branch
    %252 = sbr.rel (0) target = $region45
  $region44: #{forward.3} parent=0 // pred_region
    _
  $region45: #{forward.3} parent=0 // pred_fallthru
    _

// kernel: forward.5
$region0: #{forward.5}
  #allocation0 [shape = 'u32[]', space=smem, size = 0x4, offset = 0x4, fixed_abs, tag = 'smem constant byte address 0x4 - core index']
  #allocation1 [shape = 'u32[72,128]{1,0:T(1,128)}', space=vmem, size = 0x9000, scoped, tag = 'internal scratch']
  %s0 = inlined_call_operand.vmem [shape: f32[8,8], index: 0, kind: input, shape index: {}]
  %s1 = inlined_call_operand.vmem [shape: f32[8,32], index: 1, kind: input, shape index: {}]
  %s2 = inlined_call_operand.vmem [shape: f32[1,32], index: 2, kind: input, shape index: {}]
  %s3 = inlined_call_operand.vmem [shape: f32[32,64], index: 3, kind: input, shape index: {}]
  %s4 = inlined_call_operand.vmem [shape: f32[1,64], index: 4, kind: input, shape index: {}]
  %s5 = inlined_call_operand.vmem [shape: f32[64,256], index: 5, kind: input, shape index: {}]
  %s6 = inlined_call_operand.vmem [shape: f32[1,256], index: 6, kind: input, shape index: {}]
  %s7 = inlined_call_operand.vmem [shape: f32[256,64], index: 7, kind: input, shape index: {}]
  %s8 = inlined_call_operand.vmem [shape: f32[1,64], index: 8, kind: input, shape index: {}]
  %s9 = inlined_call_operand.vmem [shape: f32[8,64], index: 9, kind: output, shape index: {0}]
  %s10 = inlined_call_operand.vmem [shape: f32[1,32], index: 10, kind: output, shape index: {1}]
  %11 = xla_tuple %s9, %s10
  %s12 = sld [smem:[#allocation0]]
  $region54: #{forward.5} parent=0
    _
  %s14 = ssub.s32 1, %s12
  %s15 = scalar_select 0, %s14, %s12
  // Predicated region
  $region2: #{forward.5} parent=0 // pred_check
    _
  $region3: #{forward.5} parent=0 // pred_check_branch
    %17 = sbr.rel (0) target = $region5
  $region4: #{forward.5} parent=0 // pred_region
    _
  $region5: #{forward.5} parent=0 // pred_fallthru
    _
  // Predicated region
  $region6: #{forward.5} parent=0 // pred_check
    _
  $region7: #{forward.5} parent=0 // pred_check_branch
    %19 = sbr.rel (0) target = $region9
  $region8: #{forward.5} parent=0 // pred_region
    _
  $region9: #{forward.5} parent=0 // pred_fallthru
    _
  // Predicated region
  $region10: #{forward.5} parent=0 // pred_check
    _
  $region11: #{forward.5} parent=0 // pred_check_branch
    %21 = sbr.rel (0) target = $region13
  $region12: #{forward.5} parent=0 // pred_region
    _
  $region13: #{forward.5} parent=0 // pred_fallthru
    _
  // Predicated region
  $region14: #{forward.5} parent=0 // pred_check
    _
  $region15: #{forward.5} parent=0 // pred_check_branch
    %23 = sbr.rel (0) target = $region17
  $region16: #{forward.5} parent=0 // pred_region
    _
  $region17: #{forward.5} parent=0 // pred_fallthru
    _
  // Predicated region
  $region18: #{forward.5} parent=0 // pred_check
    _
  $region19: #{forward.5} parent=0 // pred_check_branch
    %25 = sbr.rel (0) target = $region21
  $region20: #{forward.5} parent=0 // pred_region
    _
  $region21: #{forward.5} parent=0 // pred_fallthru
    _
  // Predicated region
  $region22: #{forward.5} parent=0 // pred_check
    _
  $region23: #{forward.5} parent=0 // pred_check_branch
    %27 = sbr.rel (0) target = $region25
  $region24: #{forward.5} parent=0 // pred_region
    _
  $region25: #{forward.5} parent=0 // pred_fallthru
    _
  // Predicated region
  $region26: #{forward.5} parent=0 // pred_check
    _
  $region27: #{forward.5} parent=0 // pred_check_branch
    %29 = sbr.rel (0) target = $region29
  $region28: #{forward.5} parent=0 // pred_region
    _
  $region29: #{forward.5} parent=0 // pred_fallthru
    _
  // Predicated region
  $region30: #{forward.5} parent=0 // pred_check
    _
  $region31: #{forward.5} parent=0 // pred_check_branch
    %31 = sbr.rel (0) target = $region33
  $region32: #{forward.5} parent=0 // pred_region
    _
  $region33: #{forward.5} parent=0 // pred_fallthru
    _
  // Predicated region
  $region34: #{forward.5} parent=0 // pred_check
    _
  $region35: #{forward.5} parent=0 // pred_check_branch
    %33 = sbr.rel (0) target = $region37
  $region36: #{forward.5} parent=0 // pred_region
    _
  $region37: #{forward.5} parent=0 // pred_fallthru
    _
  %v34 = vld [vmem:[%s0] sm:$0xff]
  %v35 = vld [vmem:[%s1] sm:$0xff]
  %v36 = vld [vmem:[%s2] sm:$0x1]
  %v38 = vperm.slane %v36, 0
  %vm40 = vcmask 64512
  %v42 = vsel %vm40, %v34, 0
  %44 = vmatpush.msra.mxu0 0.0
  %45 = vmatpush.msra.mxu0 0.0
  %46 = vmatpush.msra.mxu0 0.0
  %47 = vmatpush.msra.mxu0 0.0
  %48 = vmatpush.msra.mxu0 0.0
  %49 = vmatpush.msra.mxu0 0.0
  %50 = vmatpush.msra.mxu0 0.0
  %51 = vmatpush.msra.mxu0 0.0
  %52 = vmatpush.msra.mxu0 0.0
  %53 = vmatpush.msra.mxu0 0.0
  %54 = vmatpush.msra.mxu0 0.0
  %55 = vmatpush.msra.mxu0 0.0
  %56 = vmatpush.msra.mxu0 0.0
  %57 = vmatpush.msra.mxu0 0.0
  %58 = vmatpush.msra.mxu0 0.0
  %59 = vmatpush.msra.mxu0 %v35
  %60 = vmatmul.f32.gmra.mxu0 %v42
  %v61 = vpop.f32.mrf.mxu0
  %v62 = vadd.f32 %v38, %v61
  %63 = vdwg.mxu0
  %v64 = vmax.f32 %v62, 0.0
  %v65 = vld [vmem:[%s3] sm:$0xff]
  %v66 = vld [vmem:[%s3 + $0x8] sm:$0xff]
  %v67 = vld [vmem:[%s3 + $0x10] sm:$0xff]
  %v68 = vld [vmem:[%s3 + $0x18] sm:$0xff]
  %v69 = vld [vmem:[%s4] sm:$0x1]
  %v71 = vperm.slane %v69, 0
  %vm73 = vcmask 261120
  %v75 = vsel %vm73, %v64, 0
  %77 = vmatpush.msra.mxu0 0.0
  %78 = vmatpush.msra.mxu0 0.0
  %79 = vmatpush.msra.mxu0 0.0
  %80 = vmatpush.msra.mxu0 0.0
  %81 = vmatpush.msra.mxu0 0.0
  %82 = vmatpush.msra.mxu0 0.0
  %83 = vmatpush.msra.mxu0 0.0
  %84 = vmatpush.msra.mxu0 0.0
  %85 = vmatpush.msra.mxu0 0.0
  %86 = vmatpush.msra.mxu0 0.0
  %87 = vmatpush.msra.mxu0 0.0
  %88 = vmatpush.msra.mxu0 0.0
  %89 = vmatpush.msra.mxu0 %v68
  %90 = vmatpush.msra.mxu0 %v67
  %91 = vmatpush.msra.mxu0 %v66
  %92 = vmatpush.msra.mxu0 %v65
  %93 = vmatmul.f32.gmra.mxu0 %v75
  %v94 = vpop.f32.mrf.mxu0
  %v95 = vadd.f32 %v71, %v94
  %96 = vdwg.mxu0
  %v97 = vmax.f32 %v95, 0.0
  %v98 = vld [vmem:[%s5] sm:$0xff]
  %v99 = vld [vmem:[%s5 + $0x8] sm:$0xff]
  %v100 = vld [vmem:[%s5 + $0x10] sm:$0xff]
  %v101 = vld [vmem:[%s5 + $0x18] sm:$0xff]
  %v102 = vld [vmem:[%s5 + $0x20] sm:$0xff]
  %v103 = vld [vmem:[%s5 + $0x28] sm:$0xff]
  %v104 = vld [vmem:[%s5 + $0x30] sm:$0xff]
  %v105 = vld [vmem:[%s5 + $0x38] sm:$0xff]
  %v106 = vld [vmem:[%s5 + $0x40] sm:$0xff]
  %v107 = vld [vmem:[%s5 + $0x48] sm:$0xff]
  %v108 = vld [vmem:[%s5 + $0x50] sm:$0xff]
  %v109 = vld [vmem:[%s5 + $0x58] sm:$0xff]
  %v110 = vld [vmem:[%s5 + $0x60] sm:$0xff]
  %v111 = vld [vmem:[%s5 + $0x68] sm:$0xff]
  %v112 = vld [vmem:[%s5 + $0x70] sm:$0xff]
  %v113 = vld [vmem:[%s5 + $0x78] sm:$0xff]
  %v114 = vld [vmem:[%s6] sm:$0x3]
  %v116 = vperm.slane %v114, 0
  %v117 = vperm.slane %v114, 1
  %vm120 = vcmask 523264
  %v122 = vsel %vm120, %v97, 0
  %124 = vmatpush.msra.mxu0 0.0
  %125 = vmatpush.msra.mxu0 0.0
  %126 = vmatpush.msra.mxu0 0.0
  %127 = vmatpush.msra.mxu0 0.0
  %128 = vmatpush.msra.mxu0 0.0
  %129 = vmatpush.msra.mxu0 0.0
  %130 = vmatpush.msra.mxu0 0.0
  %131 = vmatpush.msra.mxu0 0.0
  %132 = vmatpush.msra.mxu0 %v112
  %133 = vmatpush.msra.mxu0 %v110
  %134 = vmatpush.msra.mxu0 %v108
  %135 = vmatpush.msra.mxu0 %v106
  %136 = vmatpush.msra.mxu0 %v104
  %137 = vmatpush.msra.mxu0 %v102
  %138 = vmatpush.msra.mxu0 %v100
  %139 = vmatpush.msra.mxu0 %v98
  %140 = vmatmul.f32.gmra.mxu0 %v122
  %v141 = vpop.f32.mrf.mxu0
  %v142 = vadd.f32 %v116, %v141
  %143 = vdwg.mxu0
  %144 = vmatpush.msra.mxu0 0.0
  %145 = vmatpush.msra.mxu0 0.0
  %146 = vmatpush.msra.mxu0 0.0
  %147 = vmatpush.msra.mxu0 0.0
  %148 = vmatpush.msra.mxu0 0.0
  %149 = vmatpush.msra.mxu0 0.0
  %150 = vmatpush.msra.mxu0 0.0
  %151 = vmatpush.msra.mxu0 0.0
  %152 = vmatpush.msra.mxu0 %v113
  %153 = vmatpush.msra.mxu0 %v111
  %154 = vmatpush.msra.mxu0 %v109
  %155 = vmatpush.msra.mxu0 %v107
  %156 = vmatpush.msra.mxu0 %v105
  %157 = vmatpush.msra.mxu0 %v103
  %158 = vmatpush.msra.mxu0 %v101
  %159 = vmatpush.msra.mxu0 %v99
  %160 = vmatmul.f32.gmra.mxu0 %v122
  %v161 = vpop.f32.mrf.mxu0
  %v162 = vadd.f32 %v117, %v161
  %163 = vdwg.mxu0
  %v164 = vmax.f32 %v142, 0.0
  %v165 = vmax.f32 %v162, 0.0
  %v166 = vld [vmem:[%s7] sm:$0xff]
  %v167 = vld [vmem:[%s7 + $0x8] sm:$0xff]
  %v168 = vld [vmem:[%s7 + $0x10] sm:$0xff]
  %v169 = vld [vmem:[%s7 + $0x18] sm:$0xff]
  %v170 = vld [vmem:[%s7 + $0x20] sm:$0xff]
  %v171 = vld [vmem:[%s7 + $0x28] sm:$0xff]
  %v172 = vld [vmem:[%s7 + $0x30] sm:$0xff]
  %v173 = vld [vmem:[%s7 + $0x38] sm:$0xff]
  %v174 = vld [vmem:[%s7 + $0x40] sm:$0xff]
  %v175 = vld [vmem:[%s7 + $0x48] sm:$0xff]
  %v176 = vld [vmem:[%s7 + $0x50] sm:$0xff]
  %v177 = vld [vmem:[%s7 + $0x58] sm:$0xff]
  %v178 = vld [vmem:[%s7 + $0x60] sm:$0xff]
  %v179 = vld [vmem:[%s7 + $0x68] sm:$0xff]
  %v180 = vld [vmem:[%s7 + $0x70] sm:$0xff]
  %v181 = vld [vmem:[%s7 + $0x78] sm:$0xff]
  %v182 = vld [vmem:[%s7 + $0x80] sm:$0xff]
  %v183 = vld [vmem:[%s7 + $0x88] sm:$0xff]
  %v184 = vld [vmem:[%s7 + $0x90] sm:$0xff]
  %v185 = vld [vmem:[%s7 + $0x98] sm:$0xff]
  %v186 = vld [vmem:[%s7 + $0xa0] sm:$0xff]
  %v187 = vld [vmem:[%s7 + $0xa8] sm:$0xff]
  %v188 = vld [vmem:[%s7 + $0xb0] sm:$0xff]
  %v189 = vld [vmem:[%s7 + $0xb8] sm:$0xff]
  %v190 = vld [vmem:[%s7 + $0xc0] sm:$0xff]
  %v191 = vld [vmem:[%s7 + $0xc8] sm:$0xff]
  %v192 = vld [vmem:[%s7 + $0xd0] sm:$0xff]
  %v193 = vld [vmem:[%s7 + $0xd8] sm:$0xff]
  %v194 = vld [vmem:[%s7 + $0xe0] sm:$0xff]
  %v195 = vld [vmem:[%s7 + $0xe8] sm:$0xff]
  %v196 = vld [vmem:[%s7 + $0xf0] sm:$0xff]
  %v197 = vld [vmem:[%s7 + $0xf8] sm:$0xff]
  %v198 = vld [vmem:[%s8] sm:$0x1]
  %v200 = vperm.slane %v198, 0
  %202 = vmatpush.msra.mxu0 %v181
  %203 = vmatpush.msra.mxu0 %v180
  %204 = vmatpush.msra.mxu0 %v179
  %205 = vmatpush.msra.mxu0 %v178
  %206 = vmatpush.msra.mxu0 %v177
  %207 = vmatpush.msra.mxu0 %v176
  %208 = vmatpush.msra.mxu0 %v175
  %209 = vmatpush.msra.mxu0 %v174
  %210 = vmatpush.msra.mxu0 %v173
  %211 = vmatpush.msra.mxu0 %v172
  %212 = vmatpush.msra.mxu0 %v171
  %213 = vmatpush.msra.mxu0 %v170
  %214 = vmatpush.msra.mxu0 %v169
  %215 = vmatpush.msra.mxu0 %v168
  %216 = vmatpush.msra.mxu0 %v167
  %217 = vmatpush.msra.mxu0 %v166
  %218 = vmatmul.f32.gmra.mxu0 %v164
  %v219 = vpop.f32.mrf.mxu0
  %v220 = vadd.f32 %v200, %v219
  %221 = vdwg.mxu0
  %222 = vmatpush.msra.mxu0 %v197
  %223 = vmatpush.msra.mxu0 %v196
  %224 = vmatpush.msra.mxu0 %v195
  %225 = vmatpush.msra.mxu0 %v194
  %226 = vmatpush.msra.mxu0 %v193
  %227 = vmatpush.msra.mxu0 %v192
  %228 = vmatpush.msra.mxu0 %v191
  %229 = vmatpush.msra.mxu0 %v190
  %230 = vmatpush.msra.mxu0 %v189
  %231 = vmatpush.msra.mxu0 %v188
  %232 = vmatpush.msra.mxu0 %v187
  %233 = vmatpush.msra.mxu0 %v186
  %234 = vmatpush.msra.mxu0 %v185
  %235 = vmatpush.msra.mxu0 %v184
  %236 = vmatpush.msra.mxu0 %v183
  %237 = vmatpush.msra.mxu0 %v182
  %238 = vmatmul.f32.gmra.mxu0 %v165
  %v239 = vpop.f32.mrf.mxu0
  %v240 = vadd.f32 %v220, %v239
  %241 = vdwg.mxu0
  %242 = vst.msk [vmem:[%s9] sm:$0xff] %vm120, %v240
  %v243 = vld [vmem:[%s2] sm:$0x1]
  %v244 = vmax.f32 %v243, 0.0
  %v245 = vld [vmem:[%s3] sm:$0xff]
  %v246 = vld [vmem:[%s3 + $0x8] sm:$0xff]
  %v247 = vld [vmem:[%s4] sm:$0x1]
  %vm248 = vcmask 130048
  %v250 = vsel %vm248, %v244, 0
  %252 = vmatpush.msra.mxu0 0.0
  %253 = vmatpush.msra.mxu0 0.0
  %254 = vmatpush.msra.mxu0 0.0
  %255 = vmatpush.msra.mxu0 0.0
  %256 = vmatpush.msra.mxu0 0.0
  %257 = vmatpush.msra.mxu0 0.0
  %258 = vmatpush.msra.mxu0 0.0
  %259 = vmatpush.msra.mxu0 0.0
  %260 = vmatpush.msra.mxu0 0.0
  %261 = vmatpush.msra.mxu0 0.0
  %262 = vmatpush.msra.mxu0 0.0
  %263 = vmatpush.msra.mxu0 0.0
  %264 = vmatpush.msra.mxu0 0.0
  %265 = vmatpush.msra.mxu0 0.0
  %266 = vmatpush.msra.mxu0 %v246
  %267 = vmatpush.msra.mxu0 %v245
  %268 = vmatmul.f32.gmra.mxu0 %v250
  %v269 = vpop.f32.mrf.mxu0
  %v270 = vadd.f32 %v247, %v269
  %271 = vdwg.mxu0
  %v272 = vmax.f32 %v270, 0.0
  %v273 = vld [vmem:[%s5] sm:$0xff]
  %v274 = vld [vmem:[%s5 + $0x10] sm:$0xff]
  %v275 = vld [vmem:[%s5 + $0x20] sm:$0xff]
  %v276 = vld [vmem:[%s5 + $0x30] sm:$0xff]
  %v277 = vld [vmem:[%s6] sm:$0x1]
  %v279 = vsel %vm73, %v272, 0
  %281 = vmatpush.msra.mxu0 0.0
  %282 = vmatpush.msra.mxu0 0.0
  %283 = vmatpush.msra.mxu0 0.0
  %284 = vmatpush.msra.mxu0 0.0
  %285 = vmatpush.msra.mxu0 0.0
  %286 = vmatpush.msra.mxu0 0.0
  %287 = vmatpush.msra.mxu0 0.0
  %288 = vmatpush.msra.mxu0 0.0
  %289 = vmatpush.msra.mxu0 0.0
  %290 = vmatpush.msra.mxu0 0.0
  %291 = vmatpush.msra.mxu0 0.0
  %292 = vmatpush.msra.mxu0 0.0
  %293 = vmatpush.msra.mxu0 %v276
  %294 = vmatpush.msra.mxu0 %v275
  %295 = vmatpush.msra.mxu0 %v274
  %296 = vmatpush.msra.mxu0 %v273
  %297 = vmatmul.f32.gmra.mxu0 %v279
  %v298 = vpop.f32.mrf.mxu0
  %v299 = vadd.f32 %v277, %v298
  %300 = vdwg.mxu0
  %v301 = vmax.f32 %v299, 0.0
  %v302 = vld [vmem:[%s7] sm:$0xff]
  %v303 = vld [vmem:[%s7 + $0x8] sm:$0xff]
  %v304 = vld [vmem:[%s7 + $0x10] sm:$0xff]
  %v305 = vld [vmem:[%s7 + $0x18] sm:$0xff]
  %v306 = vld [vmem:[%s7 + $0x20] sm:$0xff]
  %v307 = vld [vmem:[%s7 + $0x28] sm:$0xff]
  %v308 = vld [vmem:[%s7 + $0x30] sm:$0xff]
  %v309 = vld [vmem:[%s7 + $0x38] sm:$0xff]
  %v310 = vld [vmem:[%s7 + $0x40] sm:$0xff]
  %v311 = vld [vmem:[%s7 + $0x48] sm:$0xff]
  %v312 = vld [vmem:[%s7 + $0x50] sm:$0xff]
  %v313 = vld [vmem:[%s7 + $0x58] sm:$0xff]
  %v314 = vld [vmem:[%s7 + $0x60] sm:$0xff]
  %v315 = vld [vmem:[%s7 + $0x68] sm:$0xff]
  %v316 = vld [vmem:[%s7 + $0x70] sm:$0xff]
  %v317 = vld [vmem:[%s7 + $0x78] sm:$0xff]
  %v318 = vld [vmem:[%s8] sm:$0x1]
  %319 = vmatpush.msra.mxu0 %v317
  %320 = vmatpush.msra.mxu0 %v316
  %321 = vmatpush.msra.mxu0 %v315
  %322 = vmatpush.msra.mxu0 %v314
  %323 = vmatpush.msra.mxu0 %v313
  %324 = vmatpush.msra.mxu0 %v312
  %325 = vmatpush.msra.mxu0 %v311
  %326 = vmatpush.msra.mxu0 %v310
  %327 = vmatpush.msra.mxu0 %v309
  %328 = vmatpush.msra.mxu0 %v308
  %329 = vmatpush.msra.mxu0 %v307
  %330 = vmatpush.msra.mxu0 %v306
  %331 = vmatpush.msra.mxu0 %v305
  %332 = vmatpush.msra.mxu0 %v304
  %333 = vmatpush.msra.mxu0 %v303
  %334 = vmatpush.msra.mxu0 %v302
  %335 = vmatmul.f32.gmra.mxu0 %v301
  %v336 = vpop.f32.mrf.mxu0
  %v337 = vadd.f32 %v318, %v336
  %338 = vdwg.mxu0
  %vm339 = vcmask 253952
  %340 = vst.msk [vmem:[%s10] sm:$0x1] %vm339, %v337
  // Predicated region
  $region38: #{forward.5} parent=0 // pred_check
    _
  $region39: #{forward.5} parent=0 // pred_check_branch
    %342 = sbr.rel (0) target = $region41
  $region40: #{forward.5} parent=0 // pred_region
    _
  $region41: #{forward.5} parent=0 // pred_fallthru
    _
  // Predicated region
  $region42: #{forward.5} parent=0 // pred_check
    _
  $region43: #{forward.5} parent=0 // pred_check_branch
    %344 = sbr.rel (0) target = $region45
  $region44: #{forward.5} parent=0 // pred_region
    _
  $region45: #{forward.5} parent=0 // pred_fallthru
    _
  // Predicated region
  $region46: #{forward.5} parent=0 // pred_check
    _
  $region47: #{forward.5} parent=0 // pred_check_branch
    %346 = sbr.rel (0) target = $region49
  $region48: #{forward.5} parent=0 // pred_region
    _
  $region49: #{forward.5} parent=0 // pred_fallthru
    _
  // Predicated region
  $region50: #{forward.5} parent=0 // pred_check
    _
  $region51: #{forward.5} parent=0 // pred_check_branch
    %348 = sbr.rel (0) target = $region53
  $region52: #{forward.5} parent=0 // pred_region
    _
  $region53: #{forward.5} parent=0 // pred_fallthru
    _

</llo_original>
